<compile_context>
chip_gen: v5e
topology: v5e:2x2
jax: 0.10.0
libtpu: 0.0.40
codegen_flags: <defaults>
</compile_context>

<pallas_src>
import functools

import numpy as np
import jax
import jax.numpy as jnp
from jax import lax
from jax.experimental import pallas as pl
from jax.experimental.pallas import tpu as pltpu

EPS = 1e-5

# Column layout of the packed per-channel constant operand (B*C, 18).
_COL_TAP0 = 0            # columns 0..8 : depthwise 3x3 tap weights (BN scale folded)
_COL_BIAS = 9            # folded conv bias + BN shift
_COL_GNG, _COL_GNB = 10, 11
_COL_LAA, _COL_LAC = 12, 15   # 3 columns each: LocalAtten dconv1..3 folded affines
_N_CHAN_COLS = 18


# --------------------------------- fused Pallas kernel ---------------------------------

def _gald_kernel(*refs, n1, inv_gn_n, att_combine):
    """Fused GALDBlock forward, whole batch in one step.

    Layout: batch*channels on sublanes, spatial flattened on lanes.
      x_ref       : (BC, N)        input, N = H*W
      scat_ref    : (N, 9*N1P)     0/1 tap selection, one 128-aligned block per tap
      chan_ref    : (BC, 18)       packed per-channel constants (see _COL_* above)
      wtpg_ref    : (3*BP, BC)     [t;p;g] projections, block-diagonal over batch
      wz_ref      : (BC, BP)       grouped 1x1 z-conv, block-diagonal over batch
      mcc_ref     : (BC, BC)       GroupNorm same-group indicator (per sample)
      kup_ref     : (N1P, N)       bilinear upsample (align_corners), pad rows zero
      kupksel_ref : (N1P, N3)      pre-composed Kup∘(3x stride-2 subsample)
      kup2_ref    : (N3, N)        mask upsample rows (used as rank-1 updates)
      [mpp_ref]   : (BP, BP)       attention group indicator, only when plane//G > 1
      out_ref     : (BC, N)
    """
    if att_combine:
        (x_ref, scat_ref, chan_ref, wtpg_ref, wz_ref, mcc_ref,
         kup_ref, kupksel_ref, kup2_ref, mpp_ref, out_ref) = refs
    else:
        (x_ref, scat_ref, chan_ref, wtpg_ref, wz_ref, mcc_ref,
         kup_ref, kupksel_ref, kup2_ref, out_ref) = refs
        mpp_ref = None

    n1p = kupksel_ref.shape[0]            # padded per-tap width (multiple of 128)
    n_taps = scat_ref.shape[1] // n1p
    bp = wtpg_ref.shape[0] // 3           # batch * plane
    n3 = kup2_ref.shape[0]

    x = x_ref[...]                        # (BC, N)
    chan = chan_ref[...]                  # (BC, 18)

    # ---- GALDBlock.down: depthwise 3x3 stride-2 conv + BN + ReLU (folded) ----
    # One wide streaming MXU matmul forms all 9 taps in 128-lane-aligned blocks;
    # the per-channel tap weights are applied as VPU FMAs on aligned lane slices.
    taps = jnp.dot(x, scat_ref[...], preferred_element_type=jnp.float32)   # (BC, 9*N1P)
    acc = chan[:, _COL_TAP0:_COL_TAP0 + 1] * taps[:, 0:n1p]
    for k in range(1, n_taps):
        acc = acc + chan[:, _COL_TAP0 + k:_COL_TAP0 + k + 1] * taps[:, k * n1p:(k + 1) * n1p]
    valid = (lax.broadcasted_iota(jnp.int32, (1, n1p), 1) < n1).astype(jnp.float32)
    xd = jnp.maximum(acc + chan[:, _COL_BIAS:_COL_BIAS + 1], 0.0) * valid   # (BC, N1P)

    # ---- SpatialCGNL (dot-product kernel, use_scale=False, grouped) ----
    tpg = jnp.dot(wtpg_ref[...], xd, preferred_element_type=jnp.float32)    # (3BP, N1P)
    t, p_, g_ = tpg[0:bp], tpg[bp:2 * bp], tpg[2 * bp:3 * bp]
    s = jnp.sum(p_ * g_, axis=1, keepdims=True)                             # (BP, 1)
    if att_combine:                       # plane//groups > 1: combine within group
        s = jnp.dot(mpp_ref[...], s, preferred_element_type=jnp.float32)
    y = t * s
    z = jnp.dot(wz_ref[...], y, preferred_element_type=jnp.float32)         # (BC, N1P)

    # GroupNorm: one-pass statistics, single same-group indicator matmul per moment.
    s1 = jnp.sum(z, axis=1, keepdims=True)                                   # (BC, 1)
    s2 = jnp.sum(z * z, axis=1, keepdims=True)
    mcc = mcc_ref[...]
    mu = jnp.dot(mcc, s1, preferred_element_type=jnp.float32) * inv_gn_n
    m2 = jnp.dot(mcc, s2, preferred_element_type=jnp.float32) * inv_gn_n
    var = m2 - mu * mu
    zn = (z - mu) * lax.rsqrt(var + EPS)
    xg = zn * chan[:, _COL_GNG:_COL_GNG + 1] + chan[:, _COL_GNB:_COL_GNB + 1] + xd

    # ---- bilinear upsample (align_corners=True) back to H x W ----
    xu = jnp.dot(xg, kup_ref[...], preferred_element_type=jnp.float32)       # (BC, N)

    # ---- LocalAttenModule (subsample commuted past per-channel affines) + residual ----
    sub = jnp.dot(xg, kupksel_ref[...], preferred_element_type=jnp.float32)  # (BC, N3)
    for i in range(3):
        sub = jnp.maximum(sub * chan[:, _COL_LAA + i:_COL_LAA + i + 1]
                          + chan[:, _COL_LAC + i:_COL_LAC + i + 1], 0.0)
    kup2 = kup2_ref[...]                                                     # (N3, N)
    logits = sub[:, 0:1] * kup2[0:1, :]                 # rank-1 VPU FMAs, MXU stays free
    for i in range(1, n3):
        logits = logits + sub[:, i:i + 1] * kup2[i:i + 1, :]

    out_ref[...] = xu * (2.0 + jax.nn.sigmoid(logits))   # (xu + xu*mask) + xu


# --------------------------------- pallas_call wrapper ---------------------------------

_OPERANDS = ('scat', 'chan', 'wtpg', 'wz', 'mcc', 'kup', 'kupksel', 'kup2')


def gald_block_forward(x_nchw, der, meta):
    """x_nchw: (B, C, H, W) float32 -> (B, C, H, W)."""
    B, C, H, W = x_nchw.shape
    N = H * W
    x = x_nchw.reshape(B * C, N).astype(jnp.float32)     # free reshape, stays NCHW order

    att_combine = meta['pc'] > 1
    names = list(_OPERANDS) + (['mpp'] if att_combine else [])
    ops = [der[n] for n in names]

    kernel = functools.partial(
        _gald_kernel,
        n1=meta['N1'],
        inv_gn_n=1.0 / (meta['cc'] * meta['N1']),
        att_combine=att_combine,
    )

    def full_spec(a):
        return pl.BlockSpec(tuple(a.shape), lambda i: (0, 0))

    out = pl.pallas_call(
        kernel,
        out_shape=jax.ShapeDtypeStruct((B * C, N), jnp.float32),
        grid=(1,),
        in_specs=[full_spec(x)] + [full_spec(a) for a in ops],
        out_specs=full_spec(x),
        compiler_params=pltpu.CompilerParams(dimension_semantics=("arbitrary",)),
    )(x, *ops)
    return out.reshape(B, C, H, W)


# --------------------------------- parameter setup (glue) ---------------------------------

def _interp_matrix(out_size, in_size):
    """Bilinear (align_corners=True) interpolation matrix R (out, in): y = R @ x."""
    R = np.zeros((out_size, in_size), np.float64)
    if in_size == 1 or out_size == 1:
        R[:, 0] = 1.0
        return R.astype(np.float32)
    scale = (in_size - 1) / (out_size - 1)
    for i in range(out_size):
        src = i * scale
        i0 = min(int(np.floor(src)), in_size - 1)
        i1 = min(i0 + 1, in_size - 1)
        f = src - i0
        R[i, i0] += 1.0 - f
        R[i, i1] += f
    return R.astype(np.float32)


def make_params(B, C, P, H, W, G=8, seed=0):
    assert C % G == 0 and P % G == 0
    keys = iter(jax.random.split(jax.random.PRNGKey(seed), 48))

    def nrm(shape, s=0.2):
        return s * jax.random.normal(next(keys), shape, jnp.float32)

    def uni(shape, lo=0.5, hi=1.5):
        return jax.random.uniform(next(keys), shape, jnp.float32, lo, hi)

    raw = {
        # GALDBlock.down: depthwise 3x3 stride-2 conv (+bias) + BatchNorm
        'w_dw': nrm((9, C)), 'b_dw': nrm((C,)),
        'bn0_gamma': uni((C,)), 'bn0_beta': nrm((C,)),
        'bn0_mean': nrm((C,)), 'bn0_var': uni((C,)),
        # SpatialCGNL: t/p/g 1x1 convs (no bias), grouped z conv, GroupNorm affine
        'Wt': nrm((C, P)), 'Wp': nrm((C, P)), 'Wg': nrm((C, P)),
        'wz': nrm((C, P // G)),
        'gn_gamma': uni((C,)), 'gn_beta': nrm((C,)),
    }
    for i in (1, 2, 3):  # LocalAttenModule dconv1..3 (depthwise 1x1 stride-2 + BN)
        raw[f'la_w{i}'] = nrm((C,)); raw[f'la_b{i}'] = nrm((C,))
        raw[f'la_g{i}'] = uni((C,)); raw[f'la_be{i}'] = nrm((C,))
        raw[f'la_m{i}'] = nrm((C,)); raw[f'la_v{i}'] = uni((C,))

    pc, cc = P // G, C // G
    H1, W1 = (H - 3) // 2 + 1, (W - 3) // 2 + 1
    N, N1 = H * W, H1 * W1
    N1P = ((N1 + 127) // 128) * 128                   # per-tap block, 128-lane aligned
    eyeB = np.eye(B, dtype=np.float32)
    npr = {k: np.asarray(v) for k, v in raw.items()}
    der = {}

    # ---- packed per-channel constants (taps, bias, GN affine, LocalAtten affines) ----
    s0 = npr['bn0_gamma'] / np.sqrt(npr['bn0_var'] + EPS)
    cols = [npr['w_dw'][k] * s0 for k in range(9)]
    cols.append(s0 * (npr['b_dw'] - npr['bn0_mean']) + npr['bn0_beta'])
    cols += [npr['gn_gamma'], npr['gn_beta']]
    la_a, la_c = [], []
    for i in (1, 2, 3):
        si = npr[f'la_g{i}'] / np.sqrt(npr[f'la_v{i}'] + EPS)
        la_a.append(si * npr[f'la_w{i}'])
        la_c.append(si * (npr[f'la_b{i}'] - npr[f'la_m{i}']) + npr[f'la_be{i}'])
    cols += la_a + la_c
    chan = np.stack(cols, axis=1).astype(np.float32)          # (C, 18)
    assert chan.shape[1] == _N_CHAN_COLS
    der['chan'] = jnp.asarray(np.tile(chan, (B, 1)))          # (B*C, 18)

    # ---- single wide tap-selection matrix (stride-2, 3x3, VALID), one block per tap ----
    scat = np.zeros((N, 9 * N1P), np.float32)
    for di in range(3):
        for dj in range(3):
            k = di * 3 + dj
            for i in range(H1):
                for j in range(W1):
                    scat[(2 * i + di) * W + (2 * j + dj), k * N1P + i * W1 + j] = 1.0
    der['scat'] = jnp.asarray(scat)

    # ---- CGNL channel-mixing constants, block-diagonal over batch ----
    der['wtpg'] = jnp.asarray(np.concatenate(
        [np.kron(eyeB, npr['Wt'].T),
         np.kron(eyeB, npr['Wp'].T),
         np.kron(eyeB, npr['Wg'].T)], axis=0))                 # (3*B*P, B*C)
    wz_full = np.zeros((C, P), np.float32)
    for c in range(C):
        g = c // cc
        wz_full[c, g * pc:(g + 1) * pc] = npr['wz'][c]
    der['wz'] = jnp.asarray(np.kron(eyeB, wz_full))            # (B*C, B*P)
    grp_c = np.arange(C) // cc
    mcc = (grp_c[:, None] == grp_c[None, :]).astype(np.float32)
    der['mcc'] = jnp.asarray(np.kron(eyeB, mcc))               # (B*C, B*C)
    if pc > 1:
        grp_p = np.arange(P) // pc
        mpp = (grp_p[:, None] == grp_p[None, :]).astype(np.float32)
        der['mpp'] = jnp.asarray(np.kron(eyeB, mpp))           # (B*P, B*P)

    # ---- spatial resampling operators (shared across batch) ----
    kup = np.kron(_interp_matrix(H, H1), _interp_matrix(W, W1))   # (N, N1)
    kupT = np.zeros((N1P, N), np.float32)
    kupT[:N1] = kup.T
    der['kup'] = jnp.asarray(kupT)                                 # (N1P, N)

    idx_h, idx_w = np.arange(H), np.arange(W)
    for _ in range(3):                        # three stride-2 / kernel-1 subsamples
        idx_h, idx_w = idx_h[::2], idx_w[::2]
    sel_flat = (idx_h[:, None] * W + idx_w[None, :]).reshape(-1)   # (N3,)
    kupksel = np.zeros((N1P, sel_flat.size), np.float32)
    kupksel[:N1] = kup.T[:, sel_flat]          # pre-composed Kup ∘ subsample
    der['kupksel'] = jnp.asarray(kupksel)                          # (N1P, N3)
    der['kup2'] = jnp.asarray(np.kron(_interp_matrix(H, idx_h.size),
                                      _interp_matrix(W, idx_w.size)).T)  # (N3, N)

    meta = dict(N1=N1, N1P=N1P, cc=cc, pc=pc, G=G)
    return raw, der, meta


# --------------------------------- pure-JAX reference ---------------------------------

def _bilinear_up_ref(x, H_out, W_out):
    B, Hi, Wi, C = x.shape

    def coords(n_out, n_in):
        if n_in == 1:
            z = jnp.zeros((n_out,), jnp.int32)
            return z, z, jnp.zeros((n_out,), jnp.float32)
        src = jnp.arange(n_out, dtype=jnp.float32) * ((n_in - 1) / (n_out - 1))
        i0 = jnp.clip(jnp.floor(src).astype(jnp.int32), 0, n_in - 1)
        i1 = jnp.minimum(i0 + 1, n_in - 1)
        return i0, i1, src - i0.astype(jnp.float32)

    h0, h1, fh = coords(H_out, Hi)
    w0, w1, fw = coords(W_out, Wi)
    xr = x[:, :, w0, :] * (1.0 - fw)[None, None, :, None] + x[:, :, w1, :] * fw[None, None, :, None]
    return xr[:, h0, :, :] * (1.0 - fh)[None, :, None, None] + xr[:, h1, :, :] * fh[None, :, None, None]


def reference_forward(x_nchw, raw, G=8):
    B, C, H, W = x_nchw.shape
    x = jnp.transpose(x_nchw, (0, 2, 3, 1)).astype(jnp.float32)
    w4 = raw['w_dw'].reshape(3, 3, C)[:, :, None, :]
    y = lax.conv_general_dilated(x, w4, (2, 2), 'VALID',
                                 dimension_numbers=('NHWC', 'HWIO', 'NHWC'),
                                 feature_group_count=C) + raw['b_dw']
    y = (y - raw['bn0_mean']) / jnp.sqrt(raw['bn0_var'] + EPS) * raw['bn0_gamma'] + raw['bn0_beta']
    y = jnp.maximum(y, 0.0)
    H1, W1 = y.shape[1], y.shape[2]
    xf = y.reshape(B, H1 * W1, C)
    t, p, g = xf @ raw['Wt'], xf @ raw['Wp'], xf @ raw['Wg']
    P = t.shape[-1]
    pc, cc = P // G, C // G
    att = jnp.sum(p.reshape(B, -1, G, pc) * g.reshape(B, -1, G, pc), axis=(1, 3), keepdims=True)
    yv = t.reshape(B, -1, G, pc) * att
    wz = raw['wz'].reshape(G, cc, pc)
    z = jnp.einsum('bngr,gkr->bngk', yv, wz).reshape(B, -1, C)
    zz = z.reshape(B, -1, G, cc)
    m = jnp.mean(zz, axis=(1, 3), keepdims=True)
    v = jnp.mean((zz - m) ** 2, axis=(1, 3), keepdims=True)
    zn = ((zz - m) / jnp.sqrt(v + EPS)).reshape(B, -1, C) * raw['gn_gamma'] + raw['gn_beta']
    xcg = (zn + xf).reshape(B, H1, W1, C)
    xu = _bilinear_up_ref(xcg, H, W)

    def dconv(inp, i):
        s = inp[:, ::2, ::2, :] * raw[f'la_w{i}'] + raw[f'la_b{i}']
        s = (s - raw[f'la_m{i}']) / jnp.sqrt(raw[f'la_v{i}'] + EPS) * raw[f'la_g{i}'] + raw[f'la_be{i}']
        return jnp.maximum(s, 0.0)

    y3 = dconv(dconv(dconv(xu, 1), 2), 3)
    mask = jax.nn.sigmoid(_bilinear_up_ref(y3, H, W))
    out = (xu + xu * mask) + xu
    return jnp.transpose(out, (0, 3, 1, 2))


# ------------------------------------------ main ------------------------------------------

if __name__ == "__main__":
    B, C, P, H, W = 2, 16, 8, 16, 16            # inplane=16, plane=8, 16x16 spatial
    raw, der, meta = make_params(B, C, P, H, W, G=8, seed=0)
    x = jax.random.normal(jax.random.PRNGKey(0), (B, C, H, W), jnp.float32)

    out = jax.block_until_ready(gald_block_forward(x, der, meta))
    ref = jax.block_until_ready(reference_forward(x, raw))

    assert out.shape == (B, C, H, W)
    np.testing.assert_allclose(np.asarray(out), np.asarray(ref), rtol=2e-3, atol=2e-3)
    print("KERNEL_OK")
</pallas_src>

<mosaic_0001>
module attributes {stable_mosaic.version = 11 : i64} {
  func.func @_gald_kernel(%arg0: i32, %arg1: memref<32x256xf32, #tpu.memory_space<vmem>>, %arg2: memref<256x1152xf32, #tpu.memory_space<vmem>>, %arg3: memref<32x18xf32, #tpu.memory_space<vmem>>, %arg4: memref<48x32xf32, #tpu.memory_space<vmem>>, %arg5: memref<32x16xf32, #tpu.memory_space<vmem>>, %arg6: memref<32x32xf32, #tpu.memory_space<vmem>>, %arg7: memref<128x256xf32, #tpu.memory_space<vmem>>, %arg8: memref<128x4xf32, #tpu.memory_space<vmem>>, %arg9: memref<4x256xf32, #tpu.memory_space<vmem>>, %arg10: memref<32x256xf32, #tpu.memory_space<vmem>>) attributes {dimension_semantics = [#tpu.dimension_semantics<arbitrary>], iteration_bounds = array<i64: 1>, scalar_prefetch = 0 : i64, scratch_operands = 0 : i64, tpu.core_type = #tpu.core_type<tc>, window_params = [{pipeline_mode = #tpu.pipeline_mode<synchronous>, transform_indices = @transform_0, window_bounds = array<i64: 32, 256>}, {pipeline_mode = #tpu.pipeline_mode<synchronous>, transform_indices = @transform_1, window_bounds = array<i64: 256, 1152>}, {pipeline_mode = #tpu.pipeline_mode<synchronous>, transform_indices = @transform_2, window_bounds = array<i64: 32, 18>}, {pipeline_mode = #tpu.pipeline_mode<synchronous>, transform_indices = @transform_3, window_bounds = array<i64: 48, 32>}, {pipeline_mode = #tpu.pipeline_mode<synchronous>, transform_indices = @transform_4, window_bounds = array<i64: 32, 16>}, {pipeline_mode = #tpu.pipeline_mode<synchronous>, transform_indices = @transform_5, window_bounds = array<i64: 32, 32>}, {pipeline_mode = #tpu.pipeline_mode<synchronous>, transform_indices = @transform_6, window_bounds = array<i64: 128, 256>}, {pipeline_mode = #tpu.pipeline_mode<synchronous>, transform_indices = @transform_7, window_bounds = array<i64: 128, 4>}, {pipeline_mode = #tpu.pipeline_mode<synchronous>, transform_indices = @transform_8, window_bounds = array<i64: 4, 256>}, {pipeline_mode = #tpu.pipeline_mode<synchronous>, transform_indices = @transform_9, window_bounds = array<i64: 32, 256>}]} {
    %c0 = arith.constant 0 : index
    %c0_0 = arith.constant 0 : index
    %0 = vector.load %arg1[%c0, %c0_0] : memref<32x256xf32, #tpu.memory_space<vmem>>, vector<32x256xf32>
    %c0_1 = arith.constant 0 : index
    %c0_2 = arith.constant 0 : index
    %1 = vector.load %arg3[%c0_1, %c0_2] : memref<32x18xf32, #tpu.memory_space<vmem>>, vector<32x18xf32>
    %c0_3 = arith.constant 0 : index
    %c0_4 = arith.constant 0 : index
    %2 = vector.load %arg2[%c0_3, %c0_4] : memref<256x1152xf32, #tpu.memory_space<vmem>>, vector<256x1152xf32>
    %cst = arith.constant dense<0.000000e+00> : vector<32x1152xf32>
    %3 = tpu.matmul %0, %2, %cst {dimension_numbers = #tpu.dot_dimension_numbers<[1], [0], [0], [1], [0, 0, 1, 1], [], []>} : vector<32x256xf32>, vector<256x1152xf32>, vector<32x1152xf32> -> vector<32x1152xf32>
    %4 = vector.extract_strided_slice %1 {offsets = [0, 0], sizes = [32, 1], strides = [1, 1]} : vector<32x18xf32> to vector<32x1xf32>
    %5 = vector.extract_strided_slice %3 {offsets = [0, 0], sizes = [32, 128], strides = [1, 1]} : vector<32x1152xf32> to vector<32x128xf32>
    %6 = vector.broadcast %4 : vector<32x1xf32> to vector<32x128xf32>
    %7 = arith.mulf %6, %5 : vector<32x128xf32>
    %8 = vector.extract_strided_slice %1 {offsets = [0, 1], sizes = [32, 1], strides = [1, 1]} : vector<32x18xf32> to vector<32x1xf32>
    %9 = vector.extract_strided_slice %3 {offsets = [0, 128], sizes = [32, 128], strides = [1, 1]} : vector<32x1152xf32> to vector<32x128xf32>
    %10 = vector.broadcast %8 : vector<32x1xf32> to vector<32x128xf32>
    %11 = arith.mulf %10, %9 : vector<32x128xf32>
    %12 = arith.addf %7, %11 : vector<32x128xf32>
    %13 = vector.extract_strided_slice %1 {offsets = [0, 2], sizes = [32, 1], strides = [1, 1]} : vector<32x18xf32> to vector<32x1xf32>
    %14 = vector.extract_strided_slice %3 {offsets = [0, 256], sizes = [32, 128], strides = [1, 1]} : vector<32x1152xf32> to vector<32x128xf32>
    %15 = vector.broadcast %13 : vector<32x1xf32> to vector<32x128xf32>
    %16 = arith.mulf %15, %14 : vector<32x128xf32>
    %17 = arith.addf %12, %16 : vector<32x128xf32>
    %18 = vector.extract_strided_slice %1 {offsets = [0, 3], sizes = [32, 1], strides = [1, 1]} : vector<32x18xf32> to vector<32x1xf32>
    %19 = vector.extract_strided_slice %3 {offsets = [0, 384], sizes = [32, 128], strides = [1, 1]} : vector<32x1152xf32> to vector<32x128xf32>
    %20 = vector.broadcast %18 : vector<32x1xf32> to vector<32x128xf32>
    %21 = arith.mulf %20, %19 : vector<32x128xf32>
    %22 = arith.addf %17, %21 : vector<32x128xf32>
    %23 = vector.extract_strided_slice %1 {offsets = [0, 4], sizes = [32, 1], strides = [1, 1]} : vector<32x18xf32> to vector<32x1xf32>
    %24 = vector.extract_strided_slice %3 {offsets = [0, 512], sizes = [32, 128], strides = [1, 1]} : vector<32x1152xf32> to vector<32x128xf32>
    %25 = vector.broadcast %23 : vector<32x1xf32> to vector<32x128xf32>
    %26 = arith.mulf %25, %24 : vector<32x128xf32>
    %27 = arith.addf %22, %26 : vector<32x128xf32>
    %28 = vector.extract_strided_slice %1 {offsets = [0, 5], sizes = [32, 1], strides = [1, 1]} : vector<32x18xf32> to vector<32x1xf32>
    %29 = vector.extract_strided_slice %3 {offsets = [0, 640], sizes = [32, 128], strides = [1, 1]} : vector<32x1152xf32> to vector<32x128xf32>
    %30 = vector.broadcast %28 : vector<32x1xf32> to vector<32x128xf32>
    %31 = arith.mulf %30, %29 : vector<32x128xf32>
    %32 = arith.addf %27, %31 : vector<32x128xf32>
    %33 = vector.extract_strided_slice %1 {offsets = [0, 6], sizes = [32, 1], strides = [1, 1]} : vector<32x18xf32> to vector<32x1xf32>
    %34 = vector.extract_strided_slice %3 {offsets = [0, 768], sizes = [32, 128], strides = [1, 1]} : vector<32x1152xf32> to vector<32x128xf32>
    %35 = vector.broadcast %33 : vector<32x1xf32> to vector<32x128xf32>
    %36 = arith.mulf %35, %34 : vector<32x128xf32>
    %37 = arith.addf %32, %36 : vector<32x128xf32>
    %38 = vector.extract_strided_slice %1 {offsets = [0, 7], sizes = [32, 1], strides = [1, 1]} : vector<32x18xf32> to vector<32x1xf32>
    %39 = vector.extract_strided_slice %3 {offsets = [0, 896], sizes = [32, 128], strides = [1, 1]} : vector<32x1152xf32> to vector<32x128xf32>
    %40 = vector.broadcast %38 : vector<32x1xf32> to vector<32x128xf32>
    %41 = arith.mulf %40, %39 : vector<32x128xf32>
    %42 = arith.addf %37, %41 : vector<32x128xf32>
    %43 = vector.extract_strided_slice %1 {offsets = [0, 8], sizes = [32, 1], strides = [1, 1]} : vector<32x18xf32> to vector<32x1xf32>
    %44 = vector.extract_strided_slice %3 {offsets = [0, 1024], sizes = [32, 128], strides = [1, 1]} : vector<32x1152xf32> to vector<32x128xf32>
    %45 = vector.broadcast %43 : vector<32x1xf32> to vector<32x128xf32>
    %46 = arith.mulf %45, %44 : vector<32x128xf32>
    %47 = arith.addf %42, %46 : vector<32x128xf32>
    %48 = tpu.iota {dimensions = array<i32: 1>} : vector<1x128xi32>
    %c49_i32 = arith.constant 49 : i32
    %49 = vector.broadcast %c49_i32 : i32 to vector<1x128xi32>
    %50 = arith.cmpi slt, %48, %49 : vector<1x128xi32>
    %51 = arith.extui %50 : vector<1x128xi1> to vector<1x128xi32>
    %52 = arith.sitofp %51 : vector<1x128xi32> to vector<1x128xf32>
    %53 = vector.extract_strided_slice %1 {offsets = [0, 9], sizes = [32, 1], strides = [1, 1]} : vector<32x18xf32> to vector<32x1xf32>
    %54 = vector.broadcast %53 : vector<32x1xf32> to vector<32x128xf32>
    %55 = arith.addf %47, %54 : vector<32x128xf32>
    %cst_5 = arith.constant 0.000000e+00 : f32
    %56 = vector.broadcast %cst_5 : f32 to vector<32x128xf32>
    %57 = arith.maximumf %55, %56 : vector<32x128xf32>
    %58 = vector.broadcast %52 : vector<1x128xf32> to vector<32x128xf32>
    %59 = arith.mulf %57, %58 : vector<32x128xf32>
    %c0_6 = arith.constant 0 : index
    %c0_7 = arith.constant 0 : index
    %60 = vector.load %arg4[%c0_6, %c0_7] : memref<48x32xf32, #tpu.memory_space<vmem>>, vector<48x32xf32>
    %cst_8 = arith.constant dense<0.000000e+00> : vector<48x128xf32>
    %61 = tpu.matmul %60, %59, %cst_8 {dimension_numbers = #tpu.dot_dimension_numbers<[1], [0], [0], [1], [0, 0, 1, 1], [], []>} : vector<48x32xf32>, vector<32x128xf32>, vector<48x128xf32> -> vector<48x128xf32>
    %62 = vector.extract_strided_slice %61 {offsets = [0, 0], sizes = [16, 128], strides = [1, 1]} : vector<48x128xf32> to vector<16x128xf32>
    %63 = vector.extract_strided_slice %61 {offsets = [16, 0], sizes = [16, 128], strides = [1, 1]} : vector<48x128xf32> to vector<16x128xf32>
    %64 = vector.extract_strided_slice %61 {offsets = [32, 0], sizes = [16, 128], strides = [1, 1]} : vector<48x128xf32> to vector<16x128xf32>
    %65 = arith.mulf %63, %64 : vector<16x128xf32>
    %cst_9 = arith.constant dense<0.000000e+00> : vector<16xf32>
    %66 = vector.multi_reduction <add>, %65, %cst_9 [1] : vector<16x128xf32> to vector<16xf32>
    %67 = vector.shape_cast %66 : vector<16xf32> to vector<16x1xf32>
    %68 = vector.broadcast %67 : vector<16x1xf32> to vector<16x128xf32>
    %69 = arith.mulf %62, %68 : vector<16x128xf32>
    %c0_10 = arith.constant 0 : index
    %c0_11 = arith.constant 0 : index
    %70 = vector.load %arg5[%c0_10, %c0_11] : memref<32x16xf32, #tpu.memory_space<vmem>>, vector<32x16xf32>
    %cst_12 = arith.constant dense<0.000000e+00> : vector<32x128xf32>
    %71 = tpu.matmul %70, %69, %cst_12 {dimension_numbers = #tpu.dot_dimension_numbers<[1], [0], [0], [1], [0, 0, 1, 1], [], []>} : vector<32x16xf32>, vector<16x128xf32>, vector<32x128xf32> -> vector<32x128xf32>
    %cst_13 = arith.constant dense<0.000000e+00> : vector<32xf32>
    %72 = vector.multi_reduction <add>, %71, %cst_13 [1] : vector<32x128xf32> to vector<32xf32>
    %73 = vector.shape_cast %72 : vector<32xf32> to vector<32x1xf32>
    %74 = arith.mulf %71, %71 : vector<32x128xf32>
    %cst_14 = arith.constant dense<0.000000e+00> : vector<32xf32>
    %75 = vector.multi_reduction <add>, %74, %cst_14 [1] : vector<32x128xf32> to vector<32xf32>
    %76 = vector.shape_cast %75 : vector<32xf32> to vector<32x1xf32>
    %c0_15 = arith.constant 0 : index
    %c0_16 = arith.constant 0 : index
    %77 = vector.load %arg6[%c0_15, %c0_16] : memref<32x32xf32, #tpu.memory_space<vmem>>, vector<32x32xf32>
    %cst_17 = arith.constant dense<0.000000e+00> : vector<32x1xf32>
    %78 = tpu.matmul %77, %73, %cst_17 {dimension_numbers = #tpu.dot_dimension_numbers<[1], [0], [0], [1], [0, 0, 1, 1], [], []>} : vector<32x32xf32>, vector<32x1xf32>, vector<32x1xf32> -> vector<32x1xf32>
    %cst_18 = arith.constant 0.0102040814 : f32
    %79 = vector.broadcast %cst_18 : f32 to vector<32x1xf32>
    %80 = arith.mulf %78, %79 : vector<32x1xf32>
    %cst_19 = arith.constant dense<0.000000e+00> : vector<32x1xf32>
    %81 = tpu.matmul %77, %76, %cst_19 {dimension_numbers = #tpu.dot_dimension_numbers<[1], [0], [0], [1], [0, 0, 1, 1], [], []>} : vector<32x32xf32>, vector<32x1xf32>, vector<32x1xf32> -> vector<32x1xf32>
    %cst_20 = arith.constant 0.0102040814 : f32
    %82 = vector.broadcast %cst_20 : f32 to vector<32x1xf32>
    %83 = arith.mulf %81, %82 : vector<32x1xf32>
    %84 = arith.mulf %80, %80 : vector<32x1xf32>
    %85 = arith.subf %83, %84 : vector<32x1xf32>
    %86 = vector.broadcast %80 : vector<32x1xf32> to vector<32x128xf32>
    %87 = arith.subf %71, %86 : vector<32x128xf32>
    %cst_21 = arith.constant 9.99999974E-6 : f32
    %88 = vector.broadcast %cst_21 : f32 to vector<32x1xf32>
    %89 = arith.addf %85, %88 : vector<32x1xf32>
    %90 = math.rsqrt %89 : vector<32x1xf32>
    %91 = vector.broadcast %90 : vector<32x1xf32> to vector<32x128xf32>
    %92 = arith.mulf %87, %91 : vector<32x128xf32>
    %93 = vector.extract_strided_slice %1 {offsets = [0, 10], sizes = [32, 1], strides = [1, 1]} : vector<32x18xf32> to vector<32x1xf32>
    %94 = vector.broadcast %93 : vector<32x1xf32> to vector<32x128xf32>
    %95 = arith.mulf %92, %94 : vector<32x128xf32>
    %96 = vector.extract_strided_slice %1 {offsets = [0, 11], sizes = [32, 1], strides = [1, 1]} : vector<32x18xf32> to vector<32x1xf32>
    %97 = vector.broadcast %96 : vector<32x1xf32> to vector<32x128xf32>
    %98 = arith.addf %95, %97 : vector<32x128xf32>
    %99 = arith.addf %98, %59 : vector<32x128xf32>
    %c0_22 = arith.constant 0 : index
    %c0_23 = arith.constant 0 : index
    %100 = vector.load %arg7[%c0_22, %c0_23] : memref<128x256xf32, #tpu.memory_space<vmem>>, vector<128x256xf32>
    %cst_24 = arith.constant dense<0.000000e+00> : vector<32x256xf32>
    %101 = tpu.matmul %99, %100, %cst_24 {dimension_numbers = #tpu.dot_dimension_numbers<[1], [0], [0], [1], [0, 0, 1, 1], [], []>} : vector<32x128xf32>, vector<128x256xf32>, vector<32x256xf32> -> vector<32x256xf32>
    %c0_25 = arith.constant 0 : index
    %c0_26 = arith.constant 0 : index
    %102 = vector.load %arg8[%c0_25, %c0_26] : memref<128x4xf32, #tpu.memory_space<vmem>>, vector<128x4xf32>
    %cst_27 = arith.constant dense<0.000000e+00> : vector<32x4xf32>
    %103 = tpu.matmul %99, %102, %cst_27 {dimension_numbers = #tpu.dot_dimension_numbers<[1], [0], [0], [1], [0, 0, 1, 1], [], []>} : vector<32x128xf32>, vector<128x4xf32>, vector<32x4xf32> -> vector<32x4xf32>
    %104 = vector.extract_strided_slice %1 {offsets = [0, 12], sizes = [32, 1], strides = [1, 1]} : vector<32x18xf32> to vector<32x1xf32>
    %105 = vector.broadcast %104 : vector<32x1xf32> to vector<32x4xf32>
    %106 = arith.mulf %103, %105 : vector<32x4xf32>
    %107 = vector.extract_strided_slice %1 {offsets = [0, 15], sizes = [32, 1], strides = [1, 1]} : vector<32x18xf32> to vector<32x1xf32>
    %108 = vector.broadcast %107 : vector<32x1xf32> to vector<32x4xf32>
    %109 = arith.addf %106, %108 : vector<32x4xf32>
    %cst_28 = arith.constant 0.000000e+00 : f32
    %110 = vector.broadcast %cst_28 : f32 to vector<32x4xf32>
    %111 = arith.maximumf %109, %110 : vector<32x4xf32>
    %112 = vector.extract_strided_slice %1 {offsets = [0, 13], sizes = [32, 1], strides = [1, 1]} : vector<32x18xf32> to vector<32x1xf32>
    %113 = vector.broadcast %112 : vector<32x1xf32> to vector<32x4xf32>
    %114 = arith.mulf %111, %113 : vector<32x4xf32>
    %115 = vector.extract_strided_slice %1 {offsets = [0, 16], sizes = [32, 1], strides = [1, 1]} : vector<32x18xf32> to vector<32x1xf32>
    %116 = vector.broadcast %115 : vector<32x1xf32> to vector<32x4xf32>
    %117 = arith.addf %114, %116 : vector<32x4xf32>
    %cst_29 = arith.constant 0.000000e+00 : f32
    %118 = vector.broadcast %cst_29 : f32 to vector<32x4xf32>
    %119 = arith.maximumf %117, %118 : vector<32x4xf32>
    %120 = vector.extract_strided_slice %1 {offsets = [0, 14], sizes = [32, 1], strides = [1, 1]} : vector<32x18xf32> to vector<32x1xf32>
    %121 = vector.broadcast %120 : vector<32x1xf32> to vector<32x4xf32>
    %122 = arith.mulf %119, %121 : vector<32x4xf32>
    %123 = vector.extract_strided_slice %1 {offsets = [0, 17], sizes = [32, 1], strides = [1, 1]} : vector<32x18xf32> to vector<32x1xf32>
    %124 = vector.broadcast %123 : vector<32x1xf32> to vector<32x4xf32>
    %125 = arith.addf %122, %124 : vector<32x4xf32>
    %cst_30 = arith.constant 0.000000e+00 : f32
    %126 = vector.broadcast %cst_30 : f32 to vector<32x4xf32>
    %127 = arith.maximumf %125, %126 : vector<32x4xf32>
    %c0_31 = arith.constant 0 : index
    %c0_32 = arith.constant 0 : index
    %128 = vector.load %arg9[%c0_31, %c0_32] : memref<4x256xf32, #tpu.memory_space<vmem>>, vector<4x256xf32>
    %129 = vector.extract_strided_slice %127 {offsets = [0, 0], sizes = [32, 1], strides = [1, 1]} : vector<32x4xf32> to vector<32x1xf32>
    %130 = vector.extract_strided_slice %128 {offsets = [0, 0], sizes = [1, 256], strides = [1, 1]} : vector<4x256xf32> to vector<1x256xf32>
    %131 = vector.broadcast %129 : vector<32x1xf32> to vector<32x256xf32>
    %132 = vector.broadcast %130 : vector<1x256xf32> to vector<32x256xf32>
    %133 = arith.mulf %131, %132 : vector<32x256xf32>
    %134 = vector.extract_strided_slice %127 {offsets = [0, 1], sizes = [32, 1], strides = [1, 1]} : vector<32x4xf32> to vector<32x1xf32>
    %135 = vector.extract_strided_slice %128 {offsets = [1, 0], sizes = [1, 256], strides = [1, 1]} : vector<4x256xf32> to vector<1x256xf32>
    %136 = vector.broadcast %134 : vector<32x1xf32> to vector<32x256xf32>
    %137 = vector.broadcast %135 : vector<1x256xf32> to vector<32x256xf32>
    %138 = arith.mulf %136, %137 : vector<32x256xf32>
    %139 = arith.addf %133, %138 : vector<32x256xf32>
    %140 = vector.extract_strided_slice %127 {offsets = [0, 2], sizes = [32, 1], strides = [1, 1]} : vector<32x4xf32> to vector<32x1xf32>
    %141 = vector.extract_strided_slice %128 {offsets = [2, 0], sizes = [1, 256], strides = [1, 1]} : vector<4x256xf32> to vector<1x256xf32>
    %142 = vector.broadcast %140 : vector<32x1xf32> to vector<32x256xf32>
    %143 = vector.broadcast %141 : vector<1x256xf32> to vector<32x256xf32>
    %144 = arith.mulf %142, %143 : vector<32x256xf32>
    %145 = arith.addf %139, %144 : vector<32x256xf32>
    %146 = vector.extract_strided_slice %127 {offsets = [0, 3], sizes = [32, 1], strides = [1, 1]} : vector<32x4xf32> to vector<32x1xf32>
    %147 = vector.extract_strided_slice %128 {offsets = [3, 0], sizes = [1, 256], strides = [1, 1]} : vector<4x256xf32> to vector<1x256xf32>
    %148 = vector.broadcast %146 : vector<32x1xf32> to vector<32x256xf32>
    %149 = vector.broadcast %147 : vector<1x256xf32> to vector<32x256xf32>
    %150 = arith.mulf %148, %149 : vector<32x256xf32>
    %151 = arith.addf %145, %150 : vector<32x256xf32>
    %152 = arith.negf %151 : vector<32x256xf32>
    %153 = math.exp %152 : vector<32x256xf32>
    %cst_33 = arith.constant 1.000000e+00 : f32
    %154 = vector.broadcast %cst_33 : f32 to vector<32x256xf32>
    %155 = arith.addf %154, %153 : vector<32x256xf32>
    %156 = arith.divf %154, %155 : vector<32x256xf32>
    %cst_34 = arith.constant 2.000000e+00 : f32
    %157 = vector.broadcast %cst_34 : f32 to vector<32x256xf32>
    %158 = arith.addf %157, %156 : vector<32x256xf32>
    %159 = arith.mulf %101, %158 : vector<32x256xf32>
    %c0_35 = arith.constant 0 : index
    %c0_36 = arith.constant 0 : index
    %160 = vector.load %arg10[%c0_35, %c0_36] : memref<32x256xf32, #tpu.memory_space<vmem>>, vector<32x256xf32>
    tpu.vector_store %arg10[%c0_35, %c0_36], %159 {strides = array<i32>} : memref<32x256xf32, #tpu.memory_space<vmem>>, vector<32x256xf32>,
    return
  }
  func.func @transform_0(%arg0: i32) -> (i32, i32) {
    %c0_i32 = arith.constant 0 : i32
    %c0_i32_0 = arith.constant 0 : i32
    %c0_i32_1 = arith.constant 0 : i32
    return %c0_i32, %c0_i32_0 : i32, i32
  }
  func.func @transform_1(%arg0: i32) -> (i32, i32) {
    %c0_i32 = arith.constant 0 : i32
    %c0_i32_0 = arith.constant 0 : i32
    %c0_i32_1 = arith.constant 0 : i32
    return %c0_i32, %c0_i32_0 : i32, i32
  }
  func.func @transform_2(%arg0: i32) -> (i32, i32) {
    %c0_i32 = arith.constant 0 : i32
    %c0_i32_0 = arith.constant 0 : i32
    %c0_i32_1 = arith.constant 0 : i32
    return %c0_i32, %c0_i32_0 : i32, i32
  }
  func.func @transform_3(%arg0: i32) -> (i32, i32) {
    %c0_i32 = arith.constant 0 : i32
    %c0_i32_0 = arith.constant 0 : i32
    %c0_i32_1 = arith.constant 0 : i32
    return %c0_i32, %c0_i32_0 : i32, i32
  }
  func.func @transform_4(%arg0: i32) -> (i32, i32) {
    %c0_i32 = arith.constant 0 : i32
    %c0_i32_0 = arith.constant 0 : i32
    %c0_i32_1 = arith.constant 0 : i32
    return %c0_i32, %c0_i32_0 : i32, i32
  }
  func.func @transform_5(%arg0: i32) -> (i32, i32) {
    %c0_i32 = arith.constant 0 : i32
    %c0_i32_0 = arith.constant 0 : i32
    %c0_i32_1 = arith.constant 0 : i32
    return %c0_i32, %c0_i32_0 : i32, i32
  }
  func.func @transform_6(%arg0: i32) -> (i32, i32) {
    %c0_i32 = arith.constant 0 : i32
    %c0_i32_0 = arith.constant 0 : i32
    %c0_i32_1 = arith.constant 0 : i32
    return %c0_i32, %c0_i32_0 : i32, i32
  }
  func.func @transform_7(%arg0: i32) -> (i32, i32) {
    %c0_i32 = arith.constant 0 : i32
    %c0_i32_0 = arith.constant 0 : i32
    %c0_i32_1 = arith.constant 0 : i32
    return %c0_i32, %c0_i32_0 : i32, i32
  }
  func.func @transform_8(%arg0: i32) -> (i32, i32) {
    %c0_i32 = arith.constant 0 : i32
    %c0_i32_0 = arith.constant 0 : i32
    %c0_i32_1 = arith.constant 0 : i32
    return %c0_i32, %c0_i32_0 : i32, i32
  }
  func.func @transform_9(%arg0: i32) -> (i32, i32) {
    %c0_i32 = arith.constant 0 : i32
    %c0_i32_0 = arith.constant 0 : i32
    %c0_i32_1 = arith.constant 0 : i32
    return %c0_i32, %c0_i32_0 : i32, i32
  }
}

</mosaic_0001>

<llo_original>
// kernel: tpu_custom_call.1
$region0: #{tpu_custom_call.1}
  #allocation0 [shape = 'u32[]', space=smem, size = 0x4, offset = 0x4, fixed_abs, tag = 'smem constant byte address 0x4 - core index']
  #allocation1 [shape = 'u32[72,128]{1,0:T(1,128)}', space=vmem, size = 0x9000, scoped, tag = 'internal scratch']
  %s0 = inlined_call_operand.hbm [shape: f32[32,256], index: 0, kind: input, shape index: {}]
  %s1 = inlined_call_operand.hbm [shape: f32[256,1152], index: 1, kind: input, shape index: {}]
  %s2 = inlined_call_operand.vmem [shape: f32[32,18], index: 2, kind: input, shape index: {}]
  %s3 = inlined_call_operand.vmem [shape: f32[48,32], index: 3, kind: input, shape index: {}]
  %s4 = inlined_call_operand.vmem [shape: f32[32,16], index: 4, kind: input, shape index: {}]
  %s5 = inlined_call_operand.hbm [shape: f32[32,32], index: 5, kind: input, shape index: {}]
  %s6 = inlined_call_operand.hbm [shape: f32[128,256], index: 6, kind: input, shape index: {}]
  %s7 = inlined_call_operand.vmem [shape: f32[128,4], index: 7, kind: input, shape index: {}]
  %s8 = inlined_call_operand.hbm [shape: f32[4,256], index: 8, kind: input, shape index: {}]
  %s9 = inlined_call_operand.hbm [shape: f32[32,256], index: 9, kind: output, shape index: {}]
  %s10 = sld [smem:[#allocation0]]
  $region66: #{tpu_custom_call.1} parent=0
    _
  %s12 = ssub.s32 1, %s10
  %s13 = scalar_select 0, %s12, %s10
  $region1: #{tpu_custom_call.1} parent=0
    #allocation2 [shape = 'u8[32768]{0}', space=vmem, size = 0x8000, scoped, tag = 'input window, operand 0, single buffered']
    #allocation3 [shape = 's32[1]{0}', space=sflag, size = 0x4, scoped, tag = 'scoped memory for tpu_custom_call.1']
    #allocation4 [shape = 's32[1]{0}', space=sflag, size = 0x4, scoped, tag = 'scoped memory for tpu_custom_call.1']
    #allocation5 [shape = 'u8[1179648]{0}', space=vmem, size = 0x120000, scoped, tag = 'input window, operand 1, single buffered']
    #allocation6 [shape = 's32[1]{0}', space=sflag, size = 0x4, scoped, tag = 'scoped memory for tpu_custom_call.1']
    #allocation7 [shape = 'u8[16384]{0}', space=vmem, size = 0x4000, scoped, tag = 'input window, operand 5, single buffered']
    #allocation8 [shape = 'u8[131072]{0}', space=vmem, size = 0x20000, scoped, tag = 'input window, operand 6, single buffered']
    #allocation9 [shape = 's32[1]{0}', space=sflag, size = 0x4, scoped, tag = 'scoped memory for tpu_custom_call.1']
    #allocation10 [shape = 'u8[4096]{0}', space=vmem, size = 0x1000, scoped, tag = 'input window, operand 8, single buffered']
    #allocation11 [shape = 'u8[32768]{0}', space=vmem, size = 0x8000, scoped, tag = 'output window, operand 0, single buffered']
    %14 = vsyncpa [#allocation3], 0
    %15 = vsyncpa [#allocation6], 0
    %16 = vsyncpa [#allocation9], 0
    %17 = vsyncpa [#allocation4], 0
    // Predicated region
    $region2: #{tpu_custom_call.1} parent=1 // pred_check
      _
    $region3: #{tpu_custom_call.1} parent=1 // pred_check_branch
      %19 = sbr.rel (0) target = $region5
    $region4: #{tpu_custom_call.1} parent=1 // pred_region
      %21 = vsyncadd [#allocation3], 0
      %s22 = sshll.u32 %s0, 4
      %s23 = int_to_ptr.hbm [resolvable:$true] %s22
      %s24 = sshll.u32 [#allocation2], 4
      %s25 = int_to_ptr.vmem [resolvable:$true] %s24
      %30 = dma.hbm_to_vmem [thread:$0]  %s23, 1024, %s25, [#allocation3], 256, 256, 16
    $region5: #{tpu_custom_call.1} parent=1 // pred_fallthru
      _
    // Predicated region
    $region6: #{tpu_custom_call.1} parent=1 // pred_check
      _
    $region7: #{tpu_custom_call.1} parent=1 // pred_check_branch
      %32 = sbr.rel (0) target = $region9
    $region8: #{tpu_custom_call.1} parent=1 // pred_region
      %34 = vsyncadd [#allocation6], 0
      %s35 = sshll.u32 %s1, 4
      %s36 = int_to_ptr.hbm [resolvable:$true] %s35
      %s37 = sshll.u32 [#allocation5], 4
      %s38 = int_to_ptr.vmem [resolvable:$true] %s37
      %43 = dma.hbm_to_vmem [thread:$0]  %s36, 36864, %s38, [#allocation6], 1152, 1152, 72
    $region9: #{tpu_custom_call.1} parent=1 // pred_fallthru
      _
    // Predicated region
    $region10: #{tpu_custom_call.1} parent=1 // pred_check
      _
    $region11: #{tpu_custom_call.1} parent=1 // pred_check_branch
      %45 = sbr.rel (0) target = $region13
    $region12: #{tpu_custom_call.1} parent=1 // pred_region
      _
    $region13: #{tpu_custom_call.1} parent=1 // pred_fallthru
      _
    // Predicated region
    $region14: #{tpu_custom_call.1} parent=1 // pred_check
      _
    $region15: #{tpu_custom_call.1} parent=1 // pred_check_branch
      %47 = sbr.rel (0) target = $region17
    $region16: #{tpu_custom_call.1} parent=1 // pred_region
      _
    $region17: #{tpu_custom_call.1} parent=1 // pred_fallthru
      _
    // Predicated region
    $region18: #{tpu_custom_call.1} parent=1 // pred_check
      _
    $region19: #{tpu_custom_call.1} parent=1 // pred_check_branch
      %49 = sbr.rel (0) target = $region21
    $region20: #{tpu_custom_call.1} parent=1 // pred_region
      _
    $region21: #{tpu_custom_call.1} parent=1 // pred_fallthru
      _
    // Predicated region
    $region22: #{tpu_custom_call.1} parent=1 // pred_check
      _
    $region23: #{tpu_custom_call.1} parent=1 // pred_check_branch
      %51 = sbr.rel (0) target = $region25
    $region24: #{tpu_custom_call.1} parent=1 // pred_region
      %53 = vsyncadd [#allocation6], 0
      %s54 = sshll.u32 %s5, 4
      %s55 = int_to_ptr.hbm [resolvable:$true] %s54
      %s56 = sshll.u32 [#allocation7], 4
      %s57 = int_to_ptr.vmem [resolvable:$true] %s56
      %62 = dma.hbm_to_vmem [thread:$0]  %s55, 512, %s57, [#allocation6], 128, 128, 8
    $region25: #{tpu_custom_call.1} parent=1 // pred_fallthru
      _
    // Predicated region
    $region26: #{tpu_custom_call.1} parent=1 // pred_check
      _
    $region27: #{tpu_custom_call.1} parent=1 // pred_check_branch
      %64 = sbr.rel (0) target = $region29
    $region28: #{tpu_custom_call.1} parent=1 // pred_region
      %66 = vsyncadd [#allocation9], 0
      %s67 = sshll.u32 %s6, 4
      %s68 = int_to_ptr.hbm [resolvable:$true] %s67
      %s69 = sshll.u32 [#allocation8], 4
      %s70 = int_to_ptr.vmem [resolvable:$true] %s69
      %75 = dma.hbm_to_vmem [thread:$0]  %s68, 4096, %s70, [#allocation9], 256, 256, 16
    $region29: #{tpu_custom_call.1} parent=1 // pred_fallthru
      _
    // Predicated region
    $region30: #{tpu_custom_call.1} parent=1 // pred_check
      _
    $region31: #{tpu_custom_call.1} parent=1 // pred_check_branch
      %77 = sbr.rel (0) target = $region33
    $region32: #{tpu_custom_call.1} parent=1 // pred_region
      _
    $region33: #{tpu_custom_call.1} parent=1 // pred_fallthru
      _
    // Predicated region
    $region34: #{tpu_custom_call.1} parent=1 // pred_check
      _
    $region35: #{tpu_custom_call.1} parent=1 // pred_check_branch
      %79 = sbr.rel (0) target = $region37
    $region36: #{tpu_custom_call.1} parent=1 // pred_region
      %81 = vsyncadd [#allocation9], 0
      %s83 = sshll.u32 %s8, 4
      %s84 = int_to_ptr.hbm [resolvable:$true] %s83
      %s85 = sshll.u32 [#allocation10], 4
      %s86 = int_to_ptr.vmem [resolvable:$true] %s85
      %88 = dma.hbm_to_vmem [thread:$0]  %s84, 128, %s86, [#allocation9]
    $region37: #{tpu_custom_call.1} parent=1 // pred_fallthru
      _
    // Predicated region
    $region38: #{tpu_custom_call.1} parent=1 // pred_check
      _
    $region39: #{tpu_custom_call.1} parent=1 // pred_check_branch
      %90 = sbr.rel (0) target = $region41
    $region40: #{tpu_custom_call.1} parent=1 // pred_region
      %92 = dma.done [#allocation3], 1024
    $region41: #{tpu_custom_call.1} parent=1 // pred_fallthru
      _
    // Predicated region
    $region42: #{tpu_custom_call.1} parent=1 // pred_check
      _
    $region43: #{tpu_custom_call.1} parent=1 // pred_check_branch
      %94 = sbr.rel (0) target = $region45
    $region44: #{tpu_custom_call.1} parent=1 // pred_region
      %96 = dma.done [#allocation6], 36864
    $region45: #{tpu_custom_call.1} parent=1 // pred_fallthru
      _
    // Predicated region
    $region46: #{tpu_custom_call.1} parent=1 // pred_check
      _
    $region47: #{tpu_custom_call.1} parent=1 // pred_check_branch
      %98 = sbr.rel (0) target = $region49
    $region48: #{tpu_custom_call.1} parent=1 // pred_region
      %100 = dma.done [#allocation6], 512
    $region49: #{tpu_custom_call.1} parent=1 // pred_fallthru
      _
    // Predicated region
    $region50: #{tpu_custom_call.1} parent=1 // pred_check
      _
    $region51: #{tpu_custom_call.1} parent=1 // pred_check_branch
      %102 = sbr.rel (0) target = $region53
    $region52: #{tpu_custom_call.1} parent=1 // pred_region
      %104 = dma.done [#allocation9], 4096
    $region53: #{tpu_custom_call.1} parent=1 // pred_fallthru
      _
    // Predicated region
    $region54: #{tpu_custom_call.1} parent=1 // pred_check
      _
    $region55: #{tpu_custom_call.1} parent=1 // pred_check_branch
      %106 = sbr.rel (0) target = $region57
    $region56: #{tpu_custom_call.1} parent=1 // pred_region
      %108 = dma.done [#allocation9], 128
    $region57: #{tpu_custom_call.1} parent=1 // pred_fallthru
      _
    %v109 = vld [vmem:[#allocation2] sm:$0xff]
    %v110 = vld [vmem:[#allocation2 + $0x8] sm:$0xff]
    %v111 = vld [vmem:[#allocation2 + $0x10] sm:$0xff]
    %v112 = vld [vmem:[#allocation2 + $0x18] sm:$0xff]
    %v113 = vld [vmem:[#allocation2 + $0x20] sm:$0xff]
    %v114 = vld [vmem:[#allocation2 + $0x28] sm:$0xff]
    %v115 = vld [vmem:[#allocation2 + $0x30] sm:$0xff]
    %v116 = vld [vmem:[#allocation2 + $0x38] sm:$0xff]
    %v117 = vld [vmem:[%s2] sm:$0xff]
    %v118 = vld [vmem:[%s2 + $0x8] sm:$0xff]
    %v119 = vld [vmem:[%s2 + $0x10] sm:$0xff]
    %v120 = vld [vmem:[%s2 + $0x18] sm:$0xff]
    %v121 = vld [vmem:[#allocation5] sm:$0xff]
    %v122 = vld [vmem:[#allocation5 + $0x8] sm:$0xff]
    %v123 = vld [vmem:[#allocation5 + $0x10] sm:$0xff]
    %v124 = vld [vmem:[#allocation5 + $0x18] sm:$0xff]
    %v125 = vld [vmem:[#allocation5 + $0x20] sm:$0xff]
    %v126 = vld [vmem:[#allocation5 + $0x28] sm:$0xff]
    %v127 = vld [vmem:[#allocation5 + $0x30] sm:$0xff]
    %v128 = vld [vmem:[#allocation5 + $0x38] sm:$0xff]
    %v129 = vld [vmem:[#allocation5 + $0x40] sm:$0xff]
    %v130 = vld [vmem:[#allocation5 + $0x48] sm:$0xff]
    %v131 = vld [vmem:[#allocation5 + $0x50] sm:$0xff]
    %v132 = vld [vmem:[#allocation5 + $0x58] sm:$0xff]
    %v133 = vld [vmem:[#allocation5 + $0x60] sm:$0xff]
    %v134 = vld [vmem:[#allocation5 + $0x68] sm:$0xff]
    %v135 = vld [vmem:[#allocation5 + $0x70] sm:$0xff]
    %v136 = vld [vmem:[#allocation5 + $0x78] sm:$0xff]
    %v137 = vld [vmem:[#allocation5 + $0x80] sm:$0xff]
    %v138 = vld [vmem:[#allocation5 + $0x88] sm:$0xff]
    %v139 = vld [vmem:[#allocation5 + $0x90] sm:$0xff]
    %v140 = vld [vmem:[#allocation5 + $0x98] sm:$0xff]
    %v141 = vld [vmem:[#allocation5 + $0xa0] sm:$0xff]
    %v142 = vld [vmem:[#allocation5 + $0xa8] sm:$0xff]
    %v143 = vld [vmem:[#allocation5 + $0xb0] sm:$0xff]
    %v144 = vld [vmem:[#allocation5 + $0xb8] sm:$0xff]
    %v145 = vld [vmem:[#allocation5 + $0xc0] sm:$0xff]
    %v146 = vld [vmem:[#allocation5 + $0xc8] sm:$0xff]
    %v147 = vld [vmem:[#allocation5 + $0xd0] sm:$0xff]
    %v148 = vld [vmem:[#allocation5 + $0xd8] sm:$0xff]
    %v149 = vld [vmem:[#allocation5 + $0xe0] sm:$0xff]
    %v150 = vld [vmem:[#allocation5 + $0xe8] sm:$0xff]
    %v151 = vld [vmem:[#allocation5 + $0xf0] sm:$0xff]
    %v152 = vld [vmem:[#allocation5 + $0xf8] sm:$0xff]
    %v153 = vld [vmem:[#allocation5 + $0x100] sm:$0xff]
    %v154 = vld [vmem:[#allocation5 + $0x108] sm:$0xff]
    %v155 = vld [vmem:[#allocation5 + $0x110] sm:$0xff]
    %v156 = vld [vmem:[#allocation5 + $0x118] sm:$0xff]
    %v157 = vld [vmem:[#allocation5 + $0x120] sm:$0xff]
    %v158 = vld [vmem:[#allocation5 + $0x128] sm:$0xff]
    %v159 = vld [vmem:[#allocation5 + $0x130] sm:$0xff]
    %v160 = vld [vmem:[#allocation5 + $0x138] sm:$0xff]
    %v161 = vld [vmem:[#allocation5 + $0x140] sm:$0xff]
    %v162 = vld [vmem:[#allocation5 + $0x148] sm:$0xff]
    %v163 = vld [vmem:[#allocation5 + $0x150] sm:$0xff]
    %v164 = vld [vmem:[#allocation5 + $0x158] sm:$0xff]
    %v165 = vld [vmem:[#allocation5 + $0x160] sm:$0xff]
    %v166 = vld [vmem:[#allocation5 + $0x168] sm:$0xff]
    %v167 = vld [vmem:[#allocation5 + $0x170] sm:$0xff]
    %v168 = vld [vmem:[#allocation5 + $0x178] sm:$0xff]
    %v169 = vld [vmem:[#allocation5 + $0x180] sm:$0xff]
    %v170 = vld [vmem:[#allocation5 + $0x188] sm:$0xff]
    %v171 = vld [vmem:[#allocation5 + $0x190] sm:$0xff]
    %v172 = vld [vmem:[#allocation5 + $0x198] sm:$0xff]
    %v173 = vld [vmem:[#allocation5 + $0x1a0] sm:$0xff]
    %v174 = vld [vmem:[#allocation5 + $0x1a8] sm:$0xff]
    %v175 = vld [vmem:[#allocation5 + $0x1b0] sm:$0xff]
    %v176 = vld [vmem:[#allocation5 + $0x1b8] sm:$0xff]
    %v177 = vld [vmem:[#allocation5 + $0x1c0] sm:$0xff]
    %v178 = vld [vmem:[#allocation5 + $0x1c8] sm:$0xff]
    %v179 = vld [vmem:[#allocation5 + $0x1d0] sm:$0xff]
    %v180 = vld [vmem:[#allocation5 + $0x1d8] sm:$0xff]
    %v181 = vld [vmem:[#allocation5 + $0x1e0] sm:$0xff]
    %v182 = vld [vmem:[#allocation5 + $0x1e8] sm:$0xff]
    %v183 = vld [vmem:[#allocation5 + $0x1f0] sm:$0xff]
    %v184 = vld [vmem:[#allocation5 + $0x1f8] sm:$0xff]
    %v185 = vld [vmem:[#allocation5 + $0x200] sm:$0xff]
    %v186 = vld [vmem:[#allocation5 + $0x208] sm:$0xff]
    %v187 = vld [vmem:[#allocation5 + $0x210] sm:$0xff]
    %v188 = vld [vmem:[#allocation5 + $0x218] sm:$0xff]
    %v189 = vld [vmem:[#allocation5 + $0x220] sm:$0xff]
    %v190 = vld [vmem:[#allocation5 + $0x228] sm:$0xff]
    %v191 = vld [vmem:[#allocation5 + $0x230] sm:$0xff]
    %v192 = vld [vmem:[#allocation5 + $0x238] sm:$0xff]
    %v193 = vld [vmem:[#allocation5 + $0x240] sm:$0xff]
    %v194 = vld [vmem:[#allocation5 + $0x248] sm:$0xff]
    %v195 = vld [vmem:[#allocation5 + $0x250] sm:$0xff]
    %v196 = vld [vmem:[#allocation5 + $0x258] sm:$0xff]
    %v197 = vld [vmem:[#allocation5 + $0x260] sm:$0xff]
    %v198 = vld [vmem:[#allocation5 + $0x268] sm:$0xff]
    %v199 = vld [vmem:[#allocation5 + $0x270] sm:$0xff]
    %v200 = vld [vmem:[#allocation5 + $0x278] sm:$0xff]
    %v201 = vld [vmem:[#allocation5 + $0x280] sm:$0xff]
    %v202 = vld [vmem:[#allocation5 + $0x288] sm:$0xff]
    %v203 = vld [vmem:[#allocation5 + $0x290] sm:$0xff]
    %v204 = vld [vmem:[#allocation5 + $0x298] sm:$0xff]
    %v205 = vld [vmem:[#allocation5 + $0x2a0] sm:$0xff]
    %v206 = vld [vmem:[#allocation5 + $0x2a8] sm:$0xff]
    %v207 = vld [vmem:[#allocation5 + $0x2b0] sm:$0xff]
    %v208 = vld [vmem:[#allocation5 + $0x2b8] sm:$0xff]
    %v209 = vld [vmem:[#allocation5 + $0x2c0] sm:$0xff]
    %v210 = vld [vmem:[#allocation5 + $0x2c8] sm:$0xff]
    %v211 = vld [vmem:[#allocation5 + $0x2d0] sm:$0xff]
    %v212 = vld [vmem:[#allocation5 + $0x2d8] sm:$0xff]
    %v213 = vld [vmem:[#allocation5 + $0x2e0] sm:$0xff]
    %v214 = vld [vmem:[#allocation5 + $0x2e8] sm:$0xff]
    %v215 = vld [vmem:[#allocation5 + $0x2f0] sm:$0xff]
    %v216 = vld [vmem:[#allocation5 + $0x2f8] sm:$0xff]
    %v217 = vld [vmem:[#allocation5 + $0x300] sm:$0xff]
    %v218 = vld [vmem:[#allocation5 + $0x308] sm:$0xff]
    %v219 = vld [vmem:[#allocation5 + $0x310] sm:$0xff]
    %v220 = vld [vmem:[#allocation5 + $0x318] sm:$0xff]
    %v221 = vld [vmem:[#allocation5 + $0x320] sm:$0xff]
    %v222 = vld [vmem:[#allocation5 + $0x328] sm:$0xff]
    %v223 = vld [vmem:[#allocation5 + $0x330] sm:$0xff]
    %v224 = vld [vmem:[#allocation5 + $0x338] sm:$0xff]
    %v225 = vld [vmem:[#allocation5 + $0x340] sm:$0xff]
    %v226 = vld [vmem:[#allocation5 + $0x348] sm:$0xff]
    %v227 = vld [vmem:[#allocation5 + $0x350] sm:$0xff]
    %v228 = vld [vmem:[#allocation5 + $0x358] sm:$0xff]
    %v229 = vld [vmem:[#allocation5 + $0x360] sm:$0xff]
    %v230 = vld [vmem:[#allocation5 + $0x368] sm:$0xff]
    %v231 = vld [vmem:[#allocation5 + $0x370] sm:$0xff]
    %v232 = vld [vmem:[#allocation5 + $0x378] sm:$0xff]
    %v233 = vld [vmem:[#allocation5 + $0x380] sm:$0xff]
    %v234 = vld [vmem:[#allocation5 + $0x388] sm:$0xff]
    %v235 = vld [vmem:[#allocation5 + $0x390] sm:$0xff]
    %v236 = vld [vmem:[#allocation5 + $0x398] sm:$0xff]
    %v237 = vld [vmem:[#allocation5 + $0x3a0] sm:$0xff]
    %v238 = vld [vmem:[#allocation5 + $0x3a8] sm:$0xff]
    %v239 = vld [vmem:[#allocation5 + $0x3b0] sm:$0xff]
    %v240 = vld [vmem:[#allocation5 + $0x3b8] sm:$0xff]
    %v241 = vld [vmem:[#allocation5 + $0x3c0] sm:$0xff]
    %v242 = vld [vmem:[#allocation5 + $0x3c8] sm:$0xff]
    %v243 = vld [vmem:[#allocation5 + $0x3d0] sm:$0xff]
    %v244 = vld [vmem:[#allocation5 + $0x3d8] sm:$0xff]
    %v245 = vld [vmem:[#allocation5 + $0x3e0] sm:$0xff]
    %v246 = vld [vmem:[#allocation5 + $0x3e8] sm:$0xff]
    %v247 = vld [vmem:[#allocation5 + $0x3f0] sm:$0xff]
    %v248 = vld [vmem:[#allocation5 + $0x3f8] sm:$0xff]
    %v249 = vld [vmem:[#allocation5 + $0x400] sm:$0xff]
    %v250 = vld [vmem:[#allocation5 + $0x408] sm:$0xff]
    %v251 = vld [vmem:[#allocation5 + $0x410] sm:$0xff]
    %v252 = vld [vmem:[#allocation5 + $0x418] sm:$0xff]
    %v253 = vld [vmem:[#allocation5 + $0x420] sm:$0xff]
    %v254 = vld [vmem:[#allocation5 + $0x428] sm:$0xff]
    %v255 = vld [vmem:[#allocation5 + $0x430] sm:$0xff]
    %v256 = vld [vmem:[#allocation5 + $0x438] sm:$0xff]
    %v257 = vld [vmem:[#allocation5 + $0x440] sm:$0xff]
    %v258 = vld [vmem:[#allocation5 + $0x448] sm:$0xff]
    %v259 = vld [vmem:[#allocation5 + $0x450] sm:$0xff]
    %v260 = vld [vmem:[#allocation5 + $0x458] sm:$0xff]
    %v261 = vld [vmem:[#allocation5 + $0x460] sm:$0xff]
    %v262 = vld [vmem:[#allocation5 + $0x468] sm:$0xff]
    %v263 = vld [vmem:[#allocation5 + $0x470] sm:$0xff]
    %v264 = vld [vmem:[#allocation5 + $0x478] sm:$0xff]
    %v265 = vld [vmem:[#allocation5 + $0x480] sm:$0xff]
    %v266 = vld [vmem:[#allocation5 + $0x488] sm:$0xff]
    %v267 = vld [vmem:[#allocation5 + $0x490] sm:$0xff]
    %v268 = vld [vmem:[#allocation5 + $0x498] sm:$0xff]
    %v269 = vld [vmem:[#allocation5 + $0x4a0] sm:$0xff]
    %v270 = vld [vmem:[#allocation5 + $0x4a8] sm:$0xff]
    %v271 = vld [vmem:[#allocation5 + $0x4b0] sm:$0xff]
    %v272 = vld [vmem:[#allocation5 + $0x4b8] sm:$0xff]
    %v273 = vld [vmem:[#allocation5 + $0x4c0] sm:$0xff]
    %v274 = vld [vmem:[#allocation5 + $0x4c8] sm:$0xff]
    %v275 = vld [vmem:[#allocation5 + $0x4d0] sm:$0xff]
    %v276 = vld [vmem:[#allocation5 + $0x4d8] sm:$0xff]
    %v277 = vld [vmem:[#allocation5 + $0x4e0] sm:$0xff]
    %v278 = vld [vmem:[#allocation5 + $0x4e8] sm:$0xff]
    %v279 = vld [vmem:[#allocation5 + $0x4f0] sm:$0xff]
    %v280 = vld [vmem:[#allocation5 + $0x4f8] sm:$0xff]
    %v281 = vld [vmem:[#allocation5 + $0x500] sm:$0xff]
    %v282 = vld [vmem:[#allocation5 + $0x508] sm:$0xff]
    %v283 = vld [vmem:[#allocation5 + $0x510] sm:$0xff]
    %v284 = vld [vmem:[#allocation5 + $0x518] sm:$0xff]
    %v285 = vld [vmem:[#allocation5 + $0x520] sm:$0xff]
    %v286 = vld [vmem:[#allocation5 + $0x528] sm:$0xff]
    %v287 = vld [vmem:[#allocation5 + $0x530] sm:$0xff]
    %v288 = vld [vmem:[#allocation5 + $0x538] sm:$0xff]
    %v289 = vld [vmem:[#allocation5 + $0x540] sm:$0xff]
    %v290 = vld [vmem:[#allocation5 + $0x548] sm:$0xff]
    %v291 = vld [vmem:[#allocation5 + $0x550] sm:$0xff]
    %v292 = vld [vmem:[#allocation5 + $0x558] sm:$0xff]
    %v293 = vld [vmem:[#allocation5 + $0x560] sm:$0xff]
    %v294 = vld [vmem:[#allocation5 + $0x568] sm:$0xff]
    %v295 = vld [vmem:[#allocation5 + $0x570] sm:$0xff]
    %v296 = vld [vmem:[#allocation5 + $0x578] sm:$0xff]
    %v297 = vld [vmem:[#allocation5 + $0x580] sm:$0xff]
    %v298 = vld [vmem:[#allocation5 + $0x588] sm:$0xff]
    %v299 = vld [vmem:[#allocation5 + $0x590] sm:$0xff]
    %v300 = vld [vmem:[#allocation5 + $0x598] sm:$0xff]
    %v301 = vld [vmem:[#allocation5 + $0x5a0] sm:$0xff]
    %v302 = vld [vmem:[#allocation5 + $0x5a8] sm:$0xff]
    %v303 = vld [vmem:[#allocation5 + $0x5b0] sm:$0xff]
    %v304 = vld [vmem:[#allocation5 + $0x5b8] sm:$0xff]
    %v305 = vld [vmem:[#allocation5 + $0x5c0] sm:$0xff]
    %v306 = vld [vmem:[#allocation5 + $0x5c8] sm:$0xff]
    %v307 = vld [vmem:[#allocation5 + $0x5d0] sm:$0xff]
    %v308 = vld [vmem:[#allocation5 + $0x5d8] sm:$0xff]
    %v309 = vld [vmem:[#allocation5 + $0x5e0] sm:$0xff]
    %v310 = vld [vmem:[#allocation5 + $0x5e8] sm:$0xff]
    %v311 = vld [vmem:[#allocation5 + $0x5f0] sm:$0xff]
    %v312 = vld [vmem:[#allocation5 + $0x5f8] sm:$0xff]
    %v313 = vld [vmem:[#allocation5 + $0x600] sm:$0xff]
    %v314 = vld [vmem:[#allocation5 + $0x608] sm:$0xff]
    %v315 = vld [vmem:[#allocation5 + $0x610] sm:$0xff]
    %v316 = vld [vmem:[#allocation5 + $0x618] sm:$0xff]
    %v317 = vld [vmem:[#allocation5 + $0x620] sm:$0xff]
    %v318 = vld [vmem:[#allocation5 + $0x628] sm:$0xff]
    %v319 = vld [vmem:[#allocation5 + $0x630] sm:$0xff]
    %v320 = vld [vmem:[#allocation5 + $0x638] sm:$0xff]
    %v321 = vld [vmem:[#allocation5 + $0x640] sm:$0xff]
    %v322 = vld [vmem:[#allocation5 + $0x648] sm:$0xff]
    %v323 = vld [vmem:[#allocation5 + $0x650] sm:$0xff]
    %v324 = vld [vmem:[#allocation5 + $0x658] sm:$0xff]
    %v325 = vld [vmem:[#allocation5 + $0x660] sm:$0xff]
    %v326 = vld [vmem:[#allocation5 + $0x668] sm:$0xff]
    %v327 = vld [vmem:[#allocation5 + $0x670] sm:$0xff]
    %v328 = vld [vmem:[#allocation5 + $0x678] sm:$0xff]
    %v329 = vld [vmem:[#allocation5 + $0x680] sm:$0xff]
    %v330 = vld [vmem:[#allocation5 + $0x688] sm:$0xff]
    %v331 = vld [vmem:[#allocation5 + $0x690] sm:$0xff]
    %v332 = vld [vmem:[#allocation5 + $0x698] sm:$0xff]
    %v333 = vld [vmem:[#allocation5 + $0x6a0] sm:$0xff]
    %v334 = vld [vmem:[#allocation5 + $0x6a8] sm:$0xff]
    %v335 = vld [vmem:[#allocation5 + $0x6b0] sm:$0xff]
    %v336 = vld [vmem:[#allocation5 + $0x6b8] sm:$0xff]
    %v337 = vld [vmem:[#allocation5 + $0x6c0] sm:$0xff]
    %v338 = vld [vmem:[#allocation5 + $0x6c8] sm:$0xff]
    %v339 = vld [vmem:[#allocation5 + $0x6d0] sm:$0xff]
    %v340 = vld [vmem:[#allocation5 + $0x6d8] sm:$0xff]
    %v341 = vld [vmem:[#allocation5 + $0x6e0] sm:$0xff]
    %v342 = vld [vmem:[#allocation5 + $0x6e8] sm:$0xff]
    %v343 = vld [vmem:[#allocation5 + $0x6f0] sm:$0xff]
    %v344 = vld [vmem:[#allocation5 + $0x6f8] sm:$0xff]
    %v345 = vld [vmem:[#allocation5 + $0x700] sm:$0xff]
    %v346 = vld [vmem:[#allocation5 + $0x708] sm:$0xff]
    %v347 = vld [vmem:[#allocation5 + $0x710] sm:$0xff]
    %v348 = vld [vmem:[#allocation5 + $0x718] sm:$0xff]
    %v349 = vld [vmem:[#allocation5 + $0x720] sm:$0xff]
    %v350 = vld [vmem:[#allocation5 + $0x728] sm:$0xff]
    %v351 = vld [vmem:[#allocation5 + $0x730] sm:$0xff]
    %v352 = vld [vmem:[#allocation5 + $0x738] sm:$0xff]
    %v353 = vld [vmem:[#allocation5 + $0x740] sm:$0xff]
    %v354 = vld [vmem:[#allocation5 + $0x748] sm:$0xff]
    %v355 = vld [vmem:[#allocation5 + $0x750] sm:$0xff]
    %v356 = vld [vmem:[#allocation5 + $0x758] sm:$0xff]
    %v357 = vld [vmem:[#allocation5 + $0x760] sm:$0xff]
    %v358 = vld [vmem:[#allocation5 + $0x768] sm:$0xff]
    %v359 = vld [vmem:[#allocation5 + $0x770] sm:$0xff]
    %v360 = vld [vmem:[#allocation5 + $0x778] sm:$0xff]
    %v361 = vld [vmem:[#allocation5 + $0x780] sm:$0xff]
    %v362 = vld [vmem:[#allocation5 + $0x788] sm:$0xff]
    %v363 = vld [vmem:[#allocation5 + $0x790] sm:$0xff]
    %v364 = vld [vmem:[#allocation5 + $0x798] sm:$0xff]
    %v365 = vld [vmem:[#allocation5 + $0x7a0] sm:$0xff]
    %v366 = vld [vmem:[#allocation5 + $0x7a8] sm:$0xff]
    %v367 = vld [vmem:[#allocation5 + $0x7b0] sm:$0xff]
    %v368 = vld [vmem:[#allocation5 + $0x7b8] sm:$0xff]
    %v369 = vld [vmem:[#allocation5 + $0x7c0] sm:$0xff]
    %v370 = vld [vmem:[#allocation5 + $0x7c8] sm:$0xff]
    %v371 = vld [vmem:[#allocation5 + $0x7d0] sm:$0xff]
    %v372 = vld [vmem:[#allocation5 + $0x7d8] sm:$0xff]
    %v373 = vld [vmem:[#allocation5 + $0x7e0] sm:$0xff]
    %v374 = vld [vmem:[#allocation5 + $0x7e8] sm:$0xff]
    %v375 = vld [vmem:[#allocation5 + $0x7f0] sm:$0xff]
    %v376 = vld [vmem:[#allocation5 + $0x7f8] sm:$0xff]
    %v377 = vld [vmem:[#allocation5 + $0x800] sm:$0xff]
    %v378 = vld [vmem:[#allocation5 + $0x808] sm:$0xff]
    %v379 = vld [vmem:[#allocation5 + $0x810] sm:$0xff]
    %v380 = vld [vmem:[#allocation5 + $0x818] sm:$0xff]
    %v381 = vld [vmem:[#allocation5 + $0x820] sm:$0xff]
    %v382 = vld [vmem:[#allocation5 + $0x828] sm:$0xff]
    %v383 = vld [vmem:[#allocation5 + $0x830] sm:$0xff]
    %v384 = vld [vmem:[#allocation5 + $0x838] sm:$0xff]
    %v385 = vld [vmem:[#allocation5 + $0x840] sm:$0xff]
    %v386 = vld [vmem:[#allocation5 + $0x848] sm:$0xff]
    %v387 = vld [vmem:[#allocation5 + $0x850] sm:$0xff]
    %v388 = vld [vmem:[#allocation5 + $0x858] sm:$0xff]
    %v389 = vld [vmem:[#allocation5 + $0x860] sm:$0xff]
    %v390 = vld [vmem:[#allocation5 + $0x868] sm:$0xff]
    %v391 = vld [vmem:[#allocation5 + $0x870] sm:$0xff]
    %v392 = vld [vmem:[#allocation5 + $0x878] sm:$0xff]
    %v393 = vld [vmem:[#allocation5 + $0x880] sm:$0xff]
    %v394 = vld [vmem:[#allocation5 + $0x888] sm:$0xff]
    %v395 = vld [vmem:[#allocation5 + $0x890] sm:$0xff]
    %v396 = vld [vmem:[#allocation5 + $0x898] sm:$0xff]
    %v397 = vld [vmem:[#allocation5 + $0x8a0] sm:$0xff]
    %v398 = vld [vmem:[#allocation5 + $0x8a8] sm:$0xff]
    %v399 = vld [vmem:[#allocation5 + $0x8b0] sm:$0xff]
    %v400 = vld [vmem:[#allocation5 + $0x8b8] sm:$0xff]
    %v401 = vld [vmem:[#allocation5 + $0x8c0] sm:$0xff]
    %v402 = vld [vmem:[#allocation5 + $0x8c8] sm:$0xff]
    %v403 = vld [vmem:[#allocation5 + $0x8d0] sm:$0xff]
    %v404 = vld [vmem:[#allocation5 + $0x8d8] sm:$0xff]
    %v405 = vld [vmem:[#allocation5 + $0x8e0] sm:$0xff]
    %v406 = vld [vmem:[#allocation5 + $0x8e8] sm:$0xff]
    %v407 = vld [vmem:[#allocation5 + $0x8f0] sm:$0xff]
    %v408 = vld [vmem:[#allocation5 + $0x8f8] sm:$0xff]
    %409 = vmatpush.msra.mxu0 %v256
    %410 = vmatpush.msra.mxu0 %v247
    %411 = vmatpush.msra.mxu0 %v238
    %412 = vmatpush.msra.mxu0 %v229
    %413 = vmatpush.msra.mxu0 %v220
    %414 = vmatpush.msra.mxu0 %v211
    %415 = vmatpush.msra.mxu0 %v202
    %416 = vmatpush.msra.mxu0 %v193
    %417 = vmatpush.msra.mxu0 %v184
    %418 = vmatpush.msra.mxu0 %v175
    %419 = vmatpush.msra.mxu0 %v166
    %420 = vmatpush.msra.mxu0 %v157
    %421 = vmatpush.msra.mxu0 %v148
    %422 = vmatpush.msra.mxu0 %v139
    %423 = vmatpush.msra.mxu0 %v130
    %424 = vmatpush.msra.mxu0 %v121
    %425 = vmatmul.f32.gmra.mxu0 %v109
    %v426 = vpop.f32.mrf.mxu0
    %v427 = vadd.f32 0.0, %v426
    %428 = vmatmul.f32.gmra.mxu0 %v111
    %v429 = vpop.f32.mrf.mxu0
    %v430 = vadd.f32 0.0, %v429
    %431 = vmatmul.f32.gmra.mxu0 %v113
    %v432 = vpop.f32.mrf.mxu0
    %v433 = vadd.f32 0.0, %v432
    %434 = vmatmul.f32.gmra.mxu0 %v115
    %v435 = vpop.f32.mrf.mxu0
    %v436 = vadd.f32 0.0, %v435
    %437 = vdwg.mxu0
    %438 = vmatpush.msra.mxu0 %v400
    %439 = vmatpush.msra.mxu0 %v391
    %440 = vmatpush.msra.mxu0 %v382
    %441 = vmatpush.msra.mxu0 %v373
    %442 = vmatpush.msra.mxu0 %v364
    %443 = vmatpush.msra.mxu0 %v355
    %444 = vmatpush.msra.mxu0 %v346
    %445 = vmatpush.msra.mxu0 %v337
    %446 = vmatpush.msra.mxu0 %v328
    %447 = vmatpush.msra.mxu0 %v319
    %448 = vmatpush.msra.mxu0 %v310
    %449 = vmatpush.msra.mxu0 %v301
    %450 = vmatpush.msra.mxu0 %v292
    %451 = vmatpush.msra.mxu0 %v283
    %452 = vmatpush.msra.mxu0 %v274
    %453 = vmatpush.msra.mxu0 %v265
    %454 = vmatmul.f32.gmra.mxu0 %v110
    %v455 = vpop.f32.mrf.mxu0
    %v456 = vadd.f32 %v427, %v455
    %457 = vmatmul.f32.gmra.mxu0 %v112
    %v458 = vpop.f32.mrf.mxu0
    %v459 = vadd.f32 %v430, %v458
    %460 = vmatmul.f32.gmra.mxu0 %v114
    %v461 = vpop.f32.mrf.mxu0
    %v462 = vadd.f32 %v433, %v461
    %463 = vmatmul.f32.gmra.mxu0 %v116
    %v464 = vpop.f32.mrf.mxu0
    %v465 = vadd.f32 %v436, %v464
    %466 = vdwg.mxu0
    %467 = vmatpush.msra.mxu0 %v257
    %468 = vmatpush.msra.mxu0 %v248
    %469 = vmatpush.msra.mxu0 %v239
    %470 = vmatpush.msra.mxu0 %v230
    %471 = vmatpush.msra.mxu0 %v221
    %472 = vmatpush.msra.mxu0 %v212
    %473 = vmatpush.msra.mxu0 %v203
    %474 = vmatpush.msra.mxu0 %v194
    %475 = vmatpush.msra.mxu0 %v185
    %476 = vmatpush.msra.mxu0 %v176
    %477 = vmatpush.msra.mxu0 %v167
    %478 = vmatpush.msra.mxu0 %v158
    %479 = vmatpush.msra.mxu0 %v149
    %480 = vmatpush.msra.mxu0 %v140
    %481 = vmatpush.msra.mxu0 %v131
    %482 = vmatpush.msra.mxu0 %v122
    %483 = vmatmul.f32.gmra.mxu0 %v109
    %v484 = vpop.f32.mrf.mxu0
    %v485 = vadd.f32 0.0, %v484
    %486 = vmatmul.f32.gmra.mxu0 %v111
    %v487 = vpop.f32.mrf.mxu0
    %v488 = vadd.f32 0.0, %v487
    %489 = vmatmul.f32.gmra.mxu0 %v113
    %v490 = vpop.f32.mrf.mxu0
    %v491 = vadd.f32 0.0, %v490
    %492 = vmatmul.f32.gmra.mxu0 %v115
    %v493 = vpop.f32.mrf.mxu0
    %v494 = vadd.f32 0.0, %v493
    %495 = vdwg.mxu0
    %496 = vmatpush.msra.mxu0 %v401
    %497 = vmatpush.msra.mxu0 %v392
    %498 = vmatpush.msra.mxu0 %v383
    %499 = vmatpush.msra.mxu0 %v374
    %500 = vmatpush.msra.mxu0 %v365
    %501 = vmatpush.msra.mxu0 %v356
    %502 = vmatpush.msra.mxu0 %v347
    %503 = vmatpush.msra.mxu0 %v338
    %504 = vmatpush.msra.mxu0 %v329
    %505 = vmatpush.msra.mxu0 %v320
    %506 = vmatpush.msra.mxu0 %v311
    %507 = vmatpush.msra.mxu0 %v302
    %508 = vmatpush.msra.mxu0 %v293
    %509 = vmatpush.msra.mxu0 %v284
    %510 = vmatpush.msra.mxu0 %v275
    %511 = vmatpush.msra.mxu0 %v266
    %512 = vmatmul.f32.gmra.mxu0 %v110
    %v513 = vpop.f32.mrf.mxu0
    %v514 = vadd.f32 %v485, %v513
    %515 = vmatmul.f32.gmra.mxu0 %v112
    %v516 = vpop.f32.mrf.mxu0
    %v517 = vadd.f32 %v488, %v516
    %518 = vmatmul.f32.gmra.mxu0 %v114
    %v519 = vpop.f32.mrf.mxu0
    %v520 = vadd.f32 %v491, %v519
    %521 = vmatmul.f32.gmra.mxu0 %v116
    %v522 = vpop.f32.mrf.mxu0
    %v523 = vadd.f32 %v494, %v522
    %524 = vdwg.mxu0
    %525 = vmatpush.msra.mxu0 %v258
    %526 = vmatpush.msra.mxu0 %v249
    %527 = vmatpush.msra.mxu0 %v240
    %528 = vmatpush.msra.mxu0 %v231
    %529 = vmatpush.msra.mxu0 %v222
    %530 = vmatpush.msra.mxu0 %v213
    %531 = vmatpush.msra.mxu0 %v204
    %532 = vmatpush.msra.mxu0 %v195
    %533 = vmatpush.msra.mxu0 %v186
    %534 = vmatpush.msra.mxu0 %v177
    %535 = vmatpush.msra.mxu0 %v168
    %536 = vmatpush.msra.mxu0 %v159
    %537 = vmatpush.msra.mxu0 %v150
    %538 = vmatpush.msra.mxu0 %v141
    %539 = vmatpush.msra.mxu0 %v132
    %540 = vmatpush.msra.mxu0 %v123
    %541 = vmatmul.f32.gmra.mxu0 %v109
    %v542 = vpop.f32.mrf.mxu0
    %v543 = vadd.f32 0.0, %v542
    %544 = vmatmul.f32.gmra.mxu0 %v111
    %v545 = vpop.f32.mrf.mxu0
    %v546 = vadd.f32 0.0, %v545
    %547 = vmatmul.f32.gmra.mxu0 %v113
    %v548 = vpop.f32.mrf.mxu0
    %v549 = vadd.f32 0.0, %v548
    %550 = vmatmul.f32.gmra.mxu0 %v115
    %v551 = vpop.f32.mrf.mxu0
    %v552 = vadd.f32 0.0, %v551
    %553 = vdwg.mxu0
    %554 = vmatpush.msra.mxu0 %v402
    %555 = vmatpush.msra.mxu0 %v393
    %556 = vmatpush.msra.mxu0 %v384
    %557 = vmatpush.msra.mxu0 %v375
    %558 = vmatpush.msra.mxu0 %v366
    %559 = vmatpush.msra.mxu0 %v357
    %560 = vmatpush.msra.mxu0 %v348
    %561 = vmatpush.msra.mxu0 %v339
    %562 = vmatpush.msra.mxu0 %v330
    %563 = vmatpush.msra.mxu0 %v321
    %564 = vmatpush.msra.mxu0 %v312
    %565 = vmatpush.msra.mxu0 %v303
    %566 = vmatpush.msra.mxu0 %v294
    %567 = vmatpush.msra.mxu0 %v285
    %568 = vmatpush.msra.mxu0 %v276
    %569 = vmatpush.msra.mxu0 %v267
    %570 = vmatmul.f32.gmra.mxu0 %v110
    %v571 = vpop.f32.mrf.mxu0
    %v572 = vadd.f32 %v543, %v571
    %573 = vmatmul.f32.gmra.mxu0 %v112
    %v574 = vpop.f32.mrf.mxu0
    %v575 = vadd.f32 %v546, %v574
    %576 = vmatmul.f32.gmra.mxu0 %v114
    %v577 = vpop.f32.mrf.mxu0
    %v578 = vadd.f32 %v549, %v577
    %579 = vmatmul.f32.gmra.mxu0 %v116
    %v580 = vpop.f32.mrf.mxu0
    %v581 = vadd.f32 %v552, %v580
    %582 = vdwg.mxu0
    %583 = vmatpush.msra.mxu0 %v259
    %584 = vmatpush.msra.mxu0 %v250
    %585 = vmatpush.msra.mxu0 %v241
    %586 = vmatpush.msra.mxu0 %v232
    %587 = vmatpush.msra.mxu0 %v223
    %588 = vmatpush.msra.mxu0 %v214
    %589 = vmatpush.msra.mxu0 %v205
    %590 = vmatpush.msra.mxu0 %v196
    %591 = vmatpush.msra.mxu0 %v187
    %592 = vmatpush.msra.mxu0 %v178
    %593 = vmatpush.msra.mxu0 %v169
    %594 = vmatpush.msra.mxu0 %v160
    %595 = vmatpush.msra.mxu0 %v151
    %596 = vmatpush.msra.mxu0 %v142
    %597 = vmatpush.msra.mxu0 %v133
    %598 = vmatpush.msra.mxu0 %v124
    %599 = vmatmul.f32.gmra.mxu0 %v109
    %v600 = vpop.f32.mrf.mxu0
    %v601 = vadd.f32 0.0, %v600
    %602 = vmatmul.f32.gmra.mxu0 %v111
    %v603 = vpop.f32.mrf.mxu0
    %v604 = vadd.f32 0.0, %v603
    %605 = vmatmul.f32.gmra.mxu0 %v113
    %v606 = vpop.f32.mrf.mxu0
    %v607 = vadd.f32 0.0, %v606
    %608 = vmatmul.f32.gmra.mxu0 %v115
    %v609 = vpop.f32.mrf.mxu0
    %v610 = vadd.f32 0.0, %v609
    %611 = vdwg.mxu0
    %612 = vmatpush.msra.mxu0 %v403
    %613 = vmatpush.msra.mxu0 %v394
    %614 = vmatpush.msra.mxu0 %v385
    %615 = vmatpush.msra.mxu0 %v376
    %616 = vmatpush.msra.mxu0 %v367
    %617 = vmatpush.msra.mxu0 %v358
    %618 = vmatpush.msra.mxu0 %v349
    %619 = vmatpush.msra.mxu0 %v340
    %620 = vmatpush.msra.mxu0 %v331
    %621 = vmatpush.msra.mxu0 %v322
    %622 = vmatpush.msra.mxu0 %v313
    %623 = vmatpush.msra.mxu0 %v304
    %624 = vmatpush.msra.mxu0 %v295
    %625 = vmatpush.msra.mxu0 %v286
    %626 = vmatpush.msra.mxu0 %v277
    %627 = vmatpush.msra.mxu0 %v268
    %628 = vmatmul.f32.gmra.mxu0 %v110
    %v629 = vpop.f32.mrf.mxu0
    %v630 = vadd.f32 %v601, %v629
    %631 = vmatmul.f32.gmra.mxu0 %v112
    %v632 = vpop.f32.mrf.mxu0
    %v633 = vadd.f32 %v604, %v632
    %634 = vmatmul.f32.gmra.mxu0 %v114
    %v635 = vpop.f32.mrf.mxu0
    %v636 = vadd.f32 %v607, %v635
    %637 = vmatmul.f32.gmra.mxu0 %v116
    %v638 = vpop.f32.mrf.mxu0
    %v639 = vadd.f32 %v610, %v638
    %640 = vdwg.mxu0
    %641 = vmatpush.msra.mxu0 %v260
    %642 = vmatpush.msra.mxu0 %v251
    %643 = vmatpush.msra.mxu0 %v242
    %644 = vmatpush.msra.mxu0 %v233
    %645 = vmatpush.msra.mxu0 %v224
    %646 = vmatpush.msra.mxu0 %v215
    %647 = vmatpush.msra.mxu0 %v206
    %648 = vmatpush.msra.mxu0 %v197
    %649 = vmatpush.msra.mxu0 %v188
    %650 = vmatpush.msra.mxu0 %v179
    %651 = vmatpush.msra.mxu0 %v170
    %652 = vmatpush.msra.mxu0 %v161
    %653 = vmatpush.msra.mxu0 %v152
    %654 = vmatpush.msra.mxu0 %v143
    %655 = vmatpush.msra.mxu0 %v134
    %656 = vmatpush.msra.mxu0 %v125
    %657 = vmatmul.f32.gmra.mxu0 %v109
    %v658 = vpop.f32.mrf.mxu0
    %v659 = vadd.f32 0.0, %v658
    %660 = vmatmul.f32.gmra.mxu0 %v111
    %v661 = vpop.f32.mrf.mxu0
    %v662 = vadd.f32 0.0, %v661
    %663 = vmatmul.f32.gmra.mxu0 %v113
    %v664 = vpop.f32.mrf.mxu0
    %v665 = vadd.f32 0.0, %v664
    %666 = vmatmul.f32.gmra.mxu0 %v115
    %v667 = vpop.f32.mrf.mxu0
    %v668 = vadd.f32 0.0, %v667
    %669 = vdwg.mxu0
    %670 = vmatpush.msra.mxu0 %v404
    %671 = vmatpush.msra.mxu0 %v395
    %672 = vmatpush.msra.mxu0 %v386
    %673 = vmatpush.msra.mxu0 %v377
    %674 = vmatpush.msra.mxu0 %v368
    %675 = vmatpush.msra.mxu0 %v359
    %676 = vmatpush.msra.mxu0 %v350
    %677 = vmatpush.msra.mxu0 %v341
    %678 = vmatpush.msra.mxu0 %v332
    %679 = vmatpush.msra.mxu0 %v323
    %680 = vmatpush.msra.mxu0 %v314
    %681 = vmatpush.msra.mxu0 %v305
    %682 = vmatpush.msra.mxu0 %v296
    %683 = vmatpush.msra.mxu0 %v287
    %684 = vmatpush.msra.mxu0 %v278
    %685 = vmatpush.msra.mxu0 %v269
    %686 = vmatmul.f32.gmra.mxu0 %v110
    %v687 = vpop.f32.mrf.mxu0
    %v688 = vadd.f32 %v659, %v687
    %689 = vmatmul.f32.gmra.mxu0 %v112
    %v690 = vpop.f32.mrf.mxu0
    %v691 = vadd.f32 %v662, %v690
    %692 = vmatmul.f32.gmra.mxu0 %v114
    %v693 = vpop.f32.mrf.mxu0
    %v694 = vadd.f32 %v665, %v693
    %695 = vmatmul.f32.gmra.mxu0 %v116
    %v696 = vpop.f32.mrf.mxu0
    %v697 = vadd.f32 %v668, %v696
    %698 = vdwg.mxu0
    %699 = vmatpush.msra.mxu0 %v261
    %700 = vmatpush.msra.mxu0 %v252
    %701 = vmatpush.msra.mxu0 %v243
    %702 = vmatpush.msra.mxu0 %v234
    %703 = vmatpush.msra.mxu0 %v225
    %704 = vmatpush.msra.mxu0 %v216
    %705 = vmatpush.msra.mxu0 %v207
    %706 = vmatpush.msra.mxu0 %v198
    %707 = vmatpush.msra.mxu0 %v189
    %708 = vmatpush.msra.mxu0 %v180
    %709 = vmatpush.msra.mxu0 %v171
    %710 = vmatpush.msra.mxu0 %v162
    %711 = vmatpush.msra.mxu0 %v153
    %712 = vmatpush.msra.mxu0 %v144
    %713 = vmatpush.msra.mxu0 %v135
    %714 = vmatpush.msra.mxu0 %v126
    %715 = vmatmul.f32.gmra.mxu0 %v109
    %v716 = vpop.f32.mrf.mxu0
    %v717 = vadd.f32 0.0, %v716
    %718 = vmatmul.f32.gmra.mxu0 %v111
    %v719 = vpop.f32.mrf.mxu0
    %v720 = vadd.f32 0.0, %v719
    %721 = vmatmul.f32.gmra.mxu0 %v113
    %v722 = vpop.f32.mrf.mxu0
    %v723 = vadd.f32 0.0, %v722
    %724 = vmatmul.f32.gmra.mxu0 %v115
    %v725 = vpop.f32.mrf.mxu0
    %v726 = vadd.f32 0.0, %v725
    %727 = vdwg.mxu0
    %728 = vmatpush.msra.mxu0 %v405
    %729 = vmatpush.msra.mxu0 %v396
    %730 = vmatpush.msra.mxu0 %v387
    %731 = vmatpush.msra.mxu0 %v378
    %732 = vmatpush.msra.mxu0 %v369
    %733 = vmatpush.msra.mxu0 %v360
    %734 = vmatpush.msra.mxu0 %v351
    %735 = vmatpush.msra.mxu0 %v342
    %736 = vmatpush.msra.mxu0 %v333
    %737 = vmatpush.msra.mxu0 %v324
    %738 = vmatpush.msra.mxu0 %v315
    %739 = vmatpush.msra.mxu0 %v306
    %740 = vmatpush.msra.mxu0 %v297
    %741 = vmatpush.msra.mxu0 %v288
    %742 = vmatpush.msra.mxu0 %v279
    %743 = vmatpush.msra.mxu0 %v270
    %744 = vmatmul.f32.gmra.mxu0 %v110
    %v745 = vpop.f32.mrf.mxu0
    %v746 = vadd.f32 %v717, %v745
    %747 = vmatmul.f32.gmra.mxu0 %v112
    %v748 = vpop.f32.mrf.mxu0
    %v749 = vadd.f32 %v720, %v748
    %750 = vmatmul.f32.gmra.mxu0 %v114
    %v751 = vpop.f32.mrf.mxu0
    %v752 = vadd.f32 %v723, %v751
    %753 = vmatmul.f32.gmra.mxu0 %v116
    %v754 = vpop.f32.mrf.mxu0
    %v755 = vadd.f32 %v726, %v754
    %756 = vdwg.mxu0
    %757 = vmatpush.msra.mxu0 %v262
    %758 = vmatpush.msra.mxu0 %v253
    %759 = vmatpush.msra.mxu0 %v244
    %760 = vmatpush.msra.mxu0 %v235
    %761 = vmatpush.msra.mxu0 %v226
    %762 = vmatpush.msra.mxu0 %v217
    %763 = vmatpush.msra.mxu0 %v208
    %764 = vmatpush.msra.mxu0 %v199
    %765 = vmatpush.msra.mxu0 %v190
    %766 = vmatpush.msra.mxu0 %v181
    %767 = vmatpush.msra.mxu0 %v172
    %768 = vmatpush.msra.mxu0 %v163
    %769 = vmatpush.msra.mxu0 %v154
    %770 = vmatpush.msra.mxu0 %v145
    %771 = vmatpush.msra.mxu0 %v136
    %772 = vmatpush.msra.mxu0 %v127
    %773 = vmatmul.f32.gmra.mxu0 %v109
    %v774 = vpop.f32.mrf.mxu0
    %v775 = vadd.f32 0.0, %v774
    %776 = vmatmul.f32.gmra.mxu0 %v111
    %v777 = vpop.f32.mrf.mxu0
    %v778 = vadd.f32 0.0, %v777
    %779 = vmatmul.f32.gmra.mxu0 %v113
    %v780 = vpop.f32.mrf.mxu0
    %v781 = vadd.f32 0.0, %v780
    %782 = vmatmul.f32.gmra.mxu0 %v115
    %v783 = vpop.f32.mrf.mxu0
    %v784 = vadd.f32 0.0, %v783
    %785 = vdwg.mxu0
    %786 = vmatpush.msra.mxu0 %v406
    %787 = vmatpush.msra.mxu0 %v397
    %788 = vmatpush.msra.mxu0 %v388
    %789 = vmatpush.msra.mxu0 %v379
    %790 = vmatpush.msra.mxu0 %v370
    %791 = vmatpush.msra.mxu0 %v361
    %792 = vmatpush.msra.mxu0 %v352
    %793 = vmatpush.msra.mxu0 %v343
    %794 = vmatpush.msra.mxu0 %v334
    %795 = vmatpush.msra.mxu0 %v325
    %796 = vmatpush.msra.mxu0 %v316
    %797 = vmatpush.msra.mxu0 %v307
    %798 = vmatpush.msra.mxu0 %v298
    %799 = vmatpush.msra.mxu0 %v289
    %800 = vmatpush.msra.mxu0 %v280
    %801 = vmatpush.msra.mxu0 %v271
    %802 = vmatmul.f32.gmra.mxu0 %v110
    %v803 = vpop.f32.mrf.mxu0
    %v804 = vadd.f32 %v775, %v803
    %805 = vmatmul.f32.gmra.mxu0 %v112
    %v806 = vpop.f32.mrf.mxu0
    %v807 = vadd.f32 %v778, %v806
    %808 = vmatmul.f32.gmra.mxu0 %v114
    %v809 = vpop.f32.mrf.mxu0
    %v810 = vadd.f32 %v781, %v809
    %811 = vmatmul.f32.gmra.mxu0 %v116
    %v812 = vpop.f32.mrf.mxu0
    %v813 = vadd.f32 %v784, %v812
    %814 = vdwg.mxu0
    %815 = vmatpush.msra.mxu0 %v263
    %816 = vmatpush.msra.mxu0 %v254
    %817 = vmatpush.msra.mxu0 %v245
    %818 = vmatpush.msra.mxu0 %v236
    %819 = vmatpush.msra.mxu0 %v227
    %820 = vmatpush.msra.mxu0 %v218
    %821 = vmatpush.msra.mxu0 %v209
    %822 = vmatpush.msra.mxu0 %v200
    %823 = vmatpush.msra.mxu0 %v191
    %824 = vmatpush.msra.mxu0 %v182
    %825 = vmatpush.msra.mxu0 %v173
    %826 = vmatpush.msra.mxu0 %v164
    %827 = vmatpush.msra.mxu0 %v155
    %828 = vmatpush.msra.mxu0 %v146
    %829 = vmatpush.msra.mxu0 %v137
    %830 = vmatpush.msra.mxu0 %v128
    %831 = vmatmul.f32.gmra.mxu0 %v109
    %v832 = vpop.f32.mrf.mxu0
    %v833 = vadd.f32 0.0, %v832
    %834 = vmatmul.f32.gmra.mxu0 %v111
    %v835 = vpop.f32.mrf.mxu0
    %v836 = vadd.f32 0.0, %v835
    %837 = vmatmul.f32.gmra.mxu0 %v113
    %v838 = vpop.f32.mrf.mxu0
    %v839 = vadd.f32 0.0, %v838
    %840 = vmatmul.f32.gmra.mxu0 %v115
    %v841 = vpop.f32.mrf.mxu0
    %v842 = vadd.f32 0.0, %v841
    %843 = vdwg.mxu0
    %844 = vmatpush.msra.mxu0 %v407
    %845 = vmatpush.msra.mxu0 %v398
    %846 = vmatpush.msra.mxu0 %v389
    %847 = vmatpush.msra.mxu0 %v380
    %848 = vmatpush.msra.mxu0 %v371
    %849 = vmatpush.msra.mxu0 %v362
    %850 = vmatpush.msra.mxu0 %v353
    %851 = vmatpush.msra.mxu0 %v344
    %852 = vmatpush.msra.mxu0 %v335
    %853 = vmatpush.msra.mxu0 %v326
    %854 = vmatpush.msra.mxu0 %v317
    %855 = vmatpush.msra.mxu0 %v308
    %856 = vmatpush.msra.mxu0 %v299
    %857 = vmatpush.msra.mxu0 %v290
    %858 = vmatpush.msra.mxu0 %v281
    %859 = vmatpush.msra.mxu0 %v272
    %860 = vmatmul.f32.gmra.mxu0 %v110
    %v861 = vpop.f32.mrf.mxu0
    %v862 = vadd.f32 %v833, %v861
    %863 = vmatmul.f32.gmra.mxu0 %v112
    %v864 = vpop.f32.mrf.mxu0
    %v865 = vadd.f32 %v836, %v864
    %866 = vmatmul.f32.gmra.mxu0 %v114
    %v867 = vpop.f32.mrf.mxu0
    %v868 = vadd.f32 %v839, %v867
    %869 = vmatmul.f32.gmra.mxu0 %v116
    %v870 = vpop.f32.mrf.mxu0
    %v871 = vadd.f32 %v842, %v870
    %872 = vdwg.mxu0
    %873 = vmatpush.msra.mxu0 %v264
    %874 = vmatpush.msra.mxu0 %v255
    %875 = vmatpush.msra.mxu0 %v246
    %876 = vmatpush.msra.mxu0 %v237
    %877 = vmatpush.msra.mxu0 %v228
    %878 = vmatpush.msra.mxu0 %v219
    %879 = vmatpush.msra.mxu0 %v210
    %880 = vmatpush.msra.mxu0 %v201
    %881 = vmatpush.msra.mxu0 %v192
    %882 = vmatpush.msra.mxu0 %v183
    %883 = vmatpush.msra.mxu0 %v174
    %884 = vmatpush.msra.mxu0 %v165
    %885 = vmatpush.msra.mxu0 %v156
    %886 = vmatpush.msra.mxu0 %v147
    %887 = vmatpush.msra.mxu0 %v138
    %888 = vmatpush.msra.mxu0 %v129
    %889 = vmatmul.f32.gmra.mxu0 %v109
    %v890 = vpop.f32.mrf.mxu0
    %v891 = vadd.f32 0.0, %v890
    %892 = vmatmul.f32.gmra.mxu0 %v111
    %v893 = vpop.f32.mrf.mxu0
    %v894 = vadd.f32 0.0, %v893
    %895 = vmatmul.f32.gmra.mxu0 %v113
    %v896 = vpop.f32.mrf.mxu0
    %v897 = vadd.f32 0.0, %v896
    %898 = vmatmul.f32.gmra.mxu0 %v115
    %v899 = vpop.f32.mrf.mxu0
    %v900 = vadd.f32 0.0, %v899
    %901 = vdwg.mxu0
    %902 = vmatpush.msra.mxu0 %v408
    %903 = vmatpush.msra.mxu0 %v399
    %904 = vmatpush.msra.mxu0 %v390
    %905 = vmatpush.msra.mxu0 %v381
    %906 = vmatpush.msra.mxu0 %v372
    %907 = vmatpush.msra.mxu0 %v363
    %908 = vmatpush.msra.mxu0 %v354
    %909 = vmatpush.msra.mxu0 %v345
    %910 = vmatpush.msra.mxu0 %v336
    %911 = vmatpush.msra.mxu0 %v327
    %912 = vmatpush.msra.mxu0 %v318
    %913 = vmatpush.msra.mxu0 %v309
    %914 = vmatpush.msra.mxu0 %v300
    %915 = vmatpush.msra.mxu0 %v291
    %916 = vmatpush.msra.mxu0 %v282
    %917 = vmatpush.msra.mxu0 %v273
    %918 = vmatmul.f32.gmra.mxu0 %v110
    %v919 = vpop.f32.mrf.mxu0
    %v920 = vadd.f32 %v891, %v919
    %921 = vmatmul.f32.gmra.mxu0 %v112
    %v922 = vpop.f32.mrf.mxu0
    %v923 = vadd.f32 %v894, %v922
    %924 = vmatmul.f32.gmra.mxu0 %v114
    %v925 = vpop.f32.mrf.mxu0
    %v926 = vadd.f32 %v897, %v925
    %927 = vmatmul.f32.gmra.mxu0 %v116
    %v928 = vpop.f32.mrf.mxu0
    %v929 = vadd.f32 %v900, %v928
    %930 = vdwg.mxu0
    %932 = vset.pattern.permute.xlu0 0
    %933 = vperm.xlu0 %932, %v117
    %v934 = vpop.permute.xlu0 %933
    %937 = vset.pattern.permute.xlu0 0
    %938 = vperm.xlu0 %937, %v118
    %v939 = vpop.permute.xlu0 %938
    %942 = vset.pattern.permute.xlu0 0
    %943 = vperm.xlu0 %942, %v119
    %v944 = vpop.permute.xlu0 %943
    %947 = vset.pattern.permute.xlu0 0
    %948 = vperm.xlu0 %947, %v120
    %v949 = vpop.permute.xlu0 %948
    %v951 = vmul.f32 %v934, %v456
    %v952 = vmul.f32 %v939, %v459
    %v953 = vmul.f32 %v944, %v462
    %v954 = vmul.f32 %v949, %v465
    %955 = vset.pattern.permute.xlu0 1
    %956 = vperm.xlu0 %955, %v117
    %v957 = vpop.permute.xlu0 %956
    %959 = vset.pattern.permute.xlu0 1
    %960 = vperm.xlu0 %959, %v118
    %v961 = vpop.permute.xlu0 %960
    %963 = vset.pattern.permute.xlu0 1
    %964 = vperm.xlu0 %963, %v119
    %v965 = vpop.permute.xlu0 %964
    %967 = vset.pattern.permute.xlu0 1
    %968 = vperm.xlu0 %967, %v120
    %v969 = vpop.permute.xlu0 %968
    %v971 = vmul.f32 %v957, %v514
    %v972 = vmul.f32 %v961, %v517
    %v973 = vmul.f32 %v965, %v520
    %v974 = vmul.f32 %v969, %v523
    %v975 = vadd.f32 %v951, %v971
    %v976 = vadd.f32 %v952, %v972
    %v977 = vadd.f32 %v953, %v973
    %v978 = vadd.f32 %v954, %v974
    %979 = vset.pattern.permute.xlu0 2
    %980 = vperm.xlu0 %979, %v117
    %v981 = vpop.permute.xlu0 %980
    %983 = vset.pattern.permute.xlu0 2
    %984 = vperm.xlu0 %983, %v118
    %v985 = vpop.permute.xlu0 %984
    %987 = vset.pattern.permute.xlu0 2
    %988 = vperm.xlu0 %987, %v119
    %v989 = vpop.permute.xlu0 %988
    %991 = vset.pattern.permute.xlu0 2
    %992 = vperm.xlu0 %991, %v120
    %v993 = vpop.permute.xlu0 %992
    %v995 = vmul.f32 %v981, %v572
    %v996 = vmul.f32 %v985, %v575
    %v997 = vmul.f32 %v989, %v578
    %v998 = vmul.f32 %v993, %v581
    %v999 = vadd.f32 %v975, %v995
    %v1000 = vadd.f32 %v976, %v996
    %v1001 = vadd.f32 %v977, %v997
    %v1002 = vadd.f32 %v978, %v998
    %1003 = vset.pattern.permute.xlu0 3
    %1004 = vperm.xlu0 %1003, %v117
    %v1005 = vpop.permute.xlu0 %1004
    %1007 = vset.pattern.permute.xlu0 3
    %1008 = vperm.xlu0 %1007, %v118
    %v1009 = vpop.permute.xlu0 %1008
    %1011 = vset.pattern.permute.xlu0 3
    %1012 = vperm.xlu0 %1011, %v119
    %v1013 = vpop.permute.xlu0 %1012
    %1015 = vset.pattern.permute.xlu0 3
    %1016 = vperm.xlu0 %1015, %v120
    %v1017 = vpop.permute.xlu0 %1016
    %v1019 = vmul.f32 %v1005, %v630
    %v1020 = vmul.f32 %v1009, %v633
    %v1021 = vmul.f32 %v1013, %v636
    %v1022 = vmul.f32 %v1017, %v639
    %v1023 = vadd.f32 %v999, %v1019
    %v1024 = vadd.f32 %v1000, %v1020
    %v1025 = vadd.f32 %v1001, %v1021
    %v1026 = vadd.f32 %v1002, %v1022
    %1027 = vset.pattern.permute.xlu0 4
    %1028 = vperm.xlu0 %1027, %v117
    %v1029 = vpop.permute.xlu0 %1028
    %1031 = vset.pattern.permute.xlu0 4
    %1032 = vperm.xlu0 %1031, %v118
    %v1033 = vpop.permute.xlu0 %1032
    %1035 = vset.pattern.permute.xlu0 4
    %1036 = vperm.xlu0 %1035, %v119
    %v1037 = vpop.permute.xlu0 %1036
    %1039 = vset.pattern.permute.xlu0 4
    %1040 = vperm.xlu0 %1039, %v120
    %v1041 = vpop.permute.xlu0 %1040
    %v1043 = vmul.f32 %v1029, %v688
    %v1044 = vmul.f32 %v1033, %v691
    %v1045 = vmul.f32 %v1037, %v694
    %v1046 = vmul.f32 %v1041, %v697
    %v1047 = vadd.f32 %v1023, %v1043
    %v1048 = vadd.f32 %v1024, %v1044
    %v1049 = vadd.f32 %v1025, %v1045
    %v1050 = vadd.f32 %v1026, %v1046
    %1051 = vset.pattern.permute.xlu0 5
    %1052 = vperm.xlu0 %1051, %v117
    %v1053 = vpop.permute.xlu0 %1052
    %1055 = vset.pattern.permute.xlu0 5
    %1056 = vperm.xlu0 %1055, %v118
    %v1057 = vpop.permute.xlu0 %1056
    %1059 = vset.pattern.permute.xlu0 5
    %1060 = vperm.xlu0 %1059, %v119
    %v1061 = vpop.permute.xlu0 %1060
    %1063 = vset.pattern.permute.xlu0 5
    %1064 = vperm.xlu0 %1063, %v120
    %v1065 = vpop.permute.xlu0 %1064
    %v1067 = vmul.f32 %v1053, %v746
    %v1068 = vmul.f32 %v1057, %v749
    %v1069 = vmul.f32 %v1061, %v752
    %v1070 = vmul.f32 %v1065, %v755
    %v1071 = vadd.f32 %v1047, %v1067
    %v1072 = vadd.f32 %v1048, %v1068
    %v1073 = vadd.f32 %v1049, %v1069
    %v1074 = vadd.f32 %v1050, %v1070
    %1075 = vset.pattern.permute.xlu0 6
    %1076 = vperm.xlu0 %1075, %v117
    %v1077 = vpop.permute.xlu0 %1076
    %1079 = vset.pattern.permute.xlu0 6
    %1080 = vperm.xlu0 %1079, %v118
    %v1081 = vpop.permute.xlu0 %1080
    %1083 = vset.pattern.permute.xlu0 6
    %1084 = vperm.xlu0 %1083, %v119
    %v1085 = vpop.permute.xlu0 %1084
    %1087 = vset.pattern.permute.xlu0 6
    %1088 = vperm.xlu0 %1087, %v120
    %v1089 = vpop.permute.xlu0 %1088
    %v1091 = vmul.f32 %v1077, %v804
    %v1092 = vmul.f32 %v1081, %v807
    %v1093 = vmul.f32 %v1085, %v810
    %v1094 = vmul.f32 %v1089, %v813
    %v1095 = vadd.f32 %v1071, %v1091
    %v1096 = vadd.f32 %v1072, %v1092
    %v1097 = vadd.f32 %v1073, %v1093
    %v1098 = vadd.f32 %v1074, %v1094
    %1099 = vset.pattern.permute.xlu0 7
    %1100 = vperm.xlu0 %1099, %v117
    %v1101 = vpop.permute.xlu0 %1100
    %1103 = vset.pattern.permute.xlu0 7
    %1104 = vperm.xlu0 %1103, %v118
    %v1105 = vpop.permute.xlu0 %1104
    %1107 = vset.pattern.permute.xlu0 7
    %1108 = vperm.xlu0 %1107, %v119
    %v1109 = vpop.permute.xlu0 %1108
    %1111 = vset.pattern.permute.xlu0 7
    %1112 = vperm.xlu0 %1111, %v120
    %v1113 = vpop.permute.xlu0 %1112
    %v1115 = vmul.f32 %v1101, %v862
    %v1116 = vmul.f32 %v1105, %v865
    %v1117 = vmul.f32 %v1109, %v868
    %v1118 = vmul.f32 %v1113, %v871
    %v1119 = vadd.f32 %v1095, %v1115
    %v1120 = vadd.f32 %v1096, %v1116
    %v1121 = vadd.f32 %v1097, %v1117
    %v1122 = vadd.f32 %v1098, %v1118
    %1123 = vset.pattern.permute.xlu0 8
    %1124 = vperm.xlu0 %1123, %v117
    %v1125 = vpop.permute.xlu0 %1124
    %1127 = vset.pattern.permute.xlu0 8
    %1128 = vperm.xlu0 %1127, %v118
    %v1129 = vpop.permute.xlu0 %1128
    %1131 = vset.pattern.permute.xlu0 8
    %1132 = vperm.xlu0 %1131, %v119
    %v1133 = vpop.permute.xlu0 %1132
    %1135 = vset.pattern.permute.xlu0 8
    %1136 = vperm.xlu0 %1135, %v120
    %v1137 = vpop.permute.xlu0 %1136
    %v1139 = vmul.f32 %v1125, %v920
    %v1140 = vmul.f32 %v1129, %v923
    %v1141 = vmul.f32 %v1133, %v926
    %v1142 = vmul.f32 %v1137, %v929
    %v1143 = vadd.f32 %v1119, %v1139
    %v1144 = vadd.f32 %v1120, %v1140
    %v1145 = vadd.f32 %v1121, %v1141
    %v1146 = vadd.f32 %v1122, %v1142
    %v1147 = vlaneseq
    %v1148 = vand.u32 %v1147, 127
    %vm1149 = vcmp.lt.s32.totalorder %v1148, 49
    %v1150 = vsel %vm1149, 1, 0
    %v1151 = vcvt.s32.f32 %v1150
    %1152 = vset.pattern.permute.xlu0 9
    %1153 = vperm.xlu0 %1152, %v117
    %v1154 = vpop.permute.xlu0 %1153
    %1156 = vset.pattern.permute.xlu0 9
    %1157 = vperm.xlu0 %1156, %v118
    %v1158 = vpop.permute.xlu0 %1157
    %1160 = vset.pattern.permute.xlu0 9
    %1161 = vperm.xlu0 %1160, %v119
    %v1162 = vpop.permute.xlu0 %1161
    %1164 = vset.pattern.permute.xlu0 9
    %1165 = vperm.xlu0 %1164, %v120
    %v1166 = vpop.permute.xlu0 %1165
    %v1168 = vadd.f32 %v1143, %v1154
    %v1169 = vadd.f32 %v1144, %v1158
    %v1170 = vadd.f32 %v1145, %v1162
    %v1171 = vadd.f32 %v1146, %v1166
    %v1172 = vmax.f32 %v1168, 0.0
    %v1173 = vmax.f32 %v1169, 0.0
    %v1174 = vmax.f32 %v1170, 0.0
    %v1175 = vmax.f32 %v1171, 0.0
    %v1176 = vmul.f32 %v1172, %v1151
    %v1177 = vmul.f32 %v1173, %v1151
    %v1178 = vmul.f32 %v1174, %v1151
    %v1179 = vmul.f32 %v1175, %v1151
    %v1180 = vld [vmem:[%s3] sm:$0xff]
    %v1181 = vld [vmem:[%s3 + $0x8] sm:$0xff]
    %v1182 = vld [vmem:[%s3 + $0x10] sm:$0xff]
    %v1183 = vld [vmem:[%s3 + $0x18] sm:$0xff]
    %v1184 = vld [vmem:[%s3 + $0x20] sm:$0xff]
    %v1185 = vld [vmem:[%s3 + $0x28] sm:$0xff]
    %vm1186 = vcmask 261120
    %v1188 = vsel %vm1186, %v1180, 0
    %v1191 = vsel %vm1186, %v1181, 0
    %v1194 = vsel %vm1186, %v1182, 0
    %v1197 = vsel %vm1186, %v1183, 0
    %v1200 = vsel %vm1186, %v1184, 0
    %v1203 = vsel %vm1186, %v1185, 0
    %1205 = vmatpush.msra.mxu0 0.0
    %1206 = vmatpush.msra.mxu0 0.0
    %1207 = vmatpush.msra.mxu0 0.0
    %1208 = vmatpush.msra.mxu0 0.0
    %1209 = vmatpush.msra.mxu0 0.0
    %1210 = vmatpush.msra.mxu0 0.0
    %1211 = vmatpush.msra.mxu0 0.0
    %1212 = vmatpush.msra.mxu0 0.0
    %1213 = vmatpush.msra.mxu0 0.0
    %1214 = vmatpush.msra.mxu0 0.0
    %1215 = vmatpush.msra.mxu0 0.0
    %1216 = vmatpush.msra.mxu0 0.0
    %1217 = vmatpush.msra.mxu0 %v1179
    %1218 = vmatpush.msra.mxu0 %v1178
    %1219 = vmatpush.msra.mxu0 %v1177
    %1220 = vmatpush.msra.mxu0 %v1176
    %1221 = vmatmul.f32.gmra.mxu0 %v1188
    %v1222 = vpop.f32.mrf.mxu0
    %v1223 = vadd.f32 0.0, %v1222
    %1224 = vmatmul.f32.gmra.mxu0 %v1191
    %v1225 = vpop.f32.mrf.mxu0
    %v1226 = vadd.f32 0.0, %v1225
    %1227 = vmatmul.f32.gmra.mxu0 %v1194
    %v1228 = vpop.f32.mrf.mxu0
    %v1229 = vadd.f32 0.0, %v1228
    %1230 = vmatmul.f32.gmra.mxu0 %v1197
    %v1231 = vpop.f32.mrf.mxu0
    %v1232 = vadd.f32 0.0, %v1231
    %1233 = vmatmul.f32.gmra.mxu0 %v1200
    %v1234 = vpop.f32.mrf.mxu0
    %v1235 = vadd.f32 0.0, %v1234
    %1236 = vmatmul.f32.gmra.mxu0 %v1203
    %v1237 = vpop.f32.mrf.mxu0
    %v1238 = vadd.f32 0.0, %v1237
    %1239 = vdwg.mxu0
    %v1240 = vmul.f32 %v1229, %v1235
    %v1241 = vmul.f32 %v1232, %v1238
    %1242 = vadd.xlane.f32.xlu0 %v1240
    %v1243 = vpop.xlane.xlu0 %1242
    %1244 = vadd.xlane.f32.xlu0 %v1241
    %v1245 = vpop.xlane.xlu0 %1244
    %v1246 = vmul.f32 %v1223, %v1243
    %v1247 = vmul.f32 %v1226, %v1245
    %v1248 = vld [vmem:[%s4] sm:$0xff]
    %v1249 = vld [vmem:[%s4 + $0x8] sm:$0xff]
    %v1250 = vld [vmem:[%s4 + $0x10] sm:$0xff]
    %v1251 = vld [vmem:[%s4 + $0x18] sm:$0xff]
    %vm1252 = vcmask 130048
    %v1254 = vsel %vm1252, %v1248, 0
    %v1257 = vsel %vm1252, %v1249, 0
    %v1260 = vsel %vm1252, %v1250, 0
    %v1263 = vsel %vm1252, %v1251, 0
    %1265 = vmatpush.msra.mxu0 0.0
    %1266 = vmatpush.msra.mxu0 0.0
    %1267 = vmatpush.msra.mxu0 0.0
    %1268 = vmatpush.msra.mxu0 0.0
    %1269 = vmatpush.msra.mxu0 0.0
    %1270 = vmatpush.msra.mxu0 0.0
    %1271 = vmatpush.msra.mxu0 0.0
    %1272 = vmatpush.msra.mxu0 0.0
    %1273 = vmatpush.msra.mxu0 0.0
    %1274 = vmatpush.msra.mxu0 0.0
    %1275 = vmatpush.msra.mxu0 0.0
    %1276 = vmatpush.msra.mxu0 0.0
    %1277 = vmatpush.msra.mxu0 0.0
    %1278 = vmatpush.msra.mxu0 0.0
    %1279 = vmatpush.msra.mxu0 %v1247
    %1280 = vmatpush.msra.mxu0 %v1246
    %1281 = vmatmul.f32.gmra.mxu0 %v1254
    %v1282 = vpop.f32.mrf.mxu0
    %v1283 = vadd.f32 0.0, %v1282
    %1284 = vmatmul.f32.gmra.mxu0 %v1257
    %v1285 = vpop.f32.mrf.mxu0
    %v1286 = vadd.f32 0.0, %v1285
    %1287 = vmatmul.f32.gmra.mxu0 %v1260
    %v1288 = vpop.f32.mrf.mxu0
    %v1289 = vadd.f32 0.0, %v1288
    %1290 = vmatmul.f32.gmra.mxu0 %v1263
    %v1291 = vpop.f32.mrf.mxu0
    %v1292 = vadd.f32 0.0, %v1291
    %1293 = vdwg.mxu0
    %1294 = vadd.xlane.f32.xlu0 %v1283
    %v1295 = vpop.xlane.xlu0 %1294
    %1296 = vadd.xlane.f32.xlu0 %v1286
    %v1297 = vpop.xlane.xlu0 %1296
    %1298 = vadd.xlane.f32.xlu0 %v1289
    %v1299 = vpop.xlane.xlu0 %1298
    %1300 = vadd.xlane.f32.xlu0 %v1292
    %v1301 = vpop.xlane.xlu0 %1300
    %v1302 = vmul.f32 %v1283, %v1283
    %v1303 = vmul.f32 %v1286, %v1286
    %v1304 = vmul.f32 %v1289, %v1289
    %v1305 = vmul.f32 %v1292, %v1292
    %1306 = vadd.xlane.f32.xlu0 %v1302
    %v1307 = vpop.xlane.xlu0 %1306
    %1308 = vadd.xlane.f32.xlu0 %v1303
    %v1309 = vpop.xlane.xlu0 %1308
    %1310 = vadd.xlane.f32.xlu0 %v1304
    %v1311 = vpop.xlane.xlu0 %1310
    %1312 = vadd.xlane.f32.xlu0 %v1305
    %v1313 = vpop.xlane.xlu0 %1312
    %v1314 = vld [vmem:[#allocation7] sm:$0xff]
    %v1315 = vld [vmem:[#allocation7 + $0x8] sm:$0xff]
    %v1316 = vld [vmem:[#allocation7 + $0x10] sm:$0xff]
    %v1317 = vld [vmem:[#allocation7 + $0x18] sm:$0xff]
    %v1319 = vsel %vm1186, %v1314, 0
    %v1322 = vsel %vm1186, %v1315, 0
    %v1325 = vsel %vm1186, %v1316, 0
    %v1328 = vsel %vm1186, %v1317, 0
    %1330 = vmatpush.msra.mxu0 0.0
    %1331 = vmatpush.msra.mxu0 0.0
    %1332 = vmatpush.msra.mxu0 0.0
    %1333 = vmatpush.msra.mxu0 0.0
    %1334 = vmatpush.msra.mxu0 0.0
    %1335 = vmatpush.msra.mxu0 0.0
    %1336 = vmatpush.msra.mxu0 0.0
    %1337 = vmatpush.msra.mxu0 0.0
    %1338 = vmatpush.msra.mxu0 0.0
    %1339 = vmatpush.msra.mxu0 0.0
    %1340 = vmatpush.msra.mxu0 0.0
    %1341 = vmatpush.msra.mxu0 0.0
    %1342 = vmatpush.msra.mxu0 %v1301
    %1343 = vmatpush.msra.mxu0 %v1299
    %1344 = vmatpush.msra.mxu0 %v1297
    %1345 = vmatpush.msra.mxu0 %v1295
    %1346 = vmatmul.f32.gmra.mxu0 %v1319
    %v1347 = vpop.f32.mrf.mxu0
    %v1348 = vadd.f32 0.0, %v1347
    %1349 = vmatmul.f32.gmra.mxu0 %v1322
    %v1350 = vpop.f32.mrf.mxu0
    %v1351 = vadd.f32 0.0, %v1350
    %1352 = vmatmul.f32.gmra.mxu0 %v1325
    %v1353 = vpop.f32.mrf.mxu0
    %v1354 = vadd.f32 0.0, %v1353
    %1355 = vmatmul.f32.gmra.mxu0 %v1328
    %v1356 = vpop.f32.mrf.mxu0
    %v1357 = vadd.f32 0.0, %v1356
    %1358 = vdwg.mxu0
    %v1359 = vmul.f32 %v1348, 0.010204081
    %v1360 = vmul.f32 %v1351, 0.010204081
    %v1361 = vmul.f32 %v1354, 0.010204081
    %v1362 = vmul.f32 %v1357, 0.010204081
    %1363 = vmatpush.msra.mxu0 0.0
    %1364 = vmatpush.msra.mxu0 0.0
    %1365 = vmatpush.msra.mxu0 0.0
    %1366 = vmatpush.msra.mxu0 0.0
    %1367 = vmatpush.msra.mxu0 0.0
    %1368 = vmatpush.msra.mxu0 0.0
    %1369 = vmatpush.msra.mxu0 0.0
    %1370 = vmatpush.msra.mxu0 0.0
    %1371 = vmatpush.msra.mxu0 0.0
    %1372 = vmatpush.msra.mxu0 0.0
    %1373 = vmatpush.msra.mxu0 0.0
    %1374 = vmatpush.msra.mxu0 0.0
    %1375 = vmatpush.msra.mxu0 %v1313
    %1376 = vmatpush.msra.mxu0 %v1311
    %1377 = vmatpush.msra.mxu0 %v1309
    %1378 = vmatpush.msra.mxu0 %v1307
    %1379 = vmatmul.f32.gmra.mxu0 %v1319
    %v1380 = vpop.f32.mrf.mxu0
    %v1381 = vadd.f32 0.0, %v1380
    %1382 = vmatmul.f32.gmra.mxu0 %v1322
    %v1383 = vpop.f32.mrf.mxu0
    %v1384 = vadd.f32 0.0, %v1383
    %1385 = vmatmul.f32.gmra.mxu0 %v1325
    %v1386 = vpop.f32.mrf.mxu0
    %v1387 = vadd.f32 0.0, %v1386
    %1388 = vmatmul.f32.gmra.mxu0 %v1328
    %v1389 = vpop.f32.mrf.mxu0
    %v1390 = vadd.f32 0.0, %v1389
    %1391 = vdwg.mxu0
    %v1392 = vmul.f32 %v1381, 0.010204081
    %v1393 = vmul.f32 %v1384, 0.010204081
    %v1394 = vmul.f32 %v1387, 0.010204081
    %v1395 = vmul.f32 %v1390, 0.010204081
    %v1396 = vmul.f32 %v1359, %v1359
    %v1397 = vmul.f32 %v1360, %v1360
    %v1398 = vmul.f32 %v1361, %v1361
    %v1399 = vmul.f32 %v1362, %v1362
    %v1400 = vsub.f32 %v1392, %v1396
    %v1401 = vsub.f32 %v1393, %v1397
    %v1402 = vsub.f32 %v1394, %v1398
    %v1403 = vsub.f32 %v1395, %v1399
    %1405 = vset.pattern.permute.xlu0 0
    %1406 = vperm.xlu0 %1405, %v1359
    %v1407 = vpop.permute.xlu0 %1406
    %1410 = vset.pattern.permute.xlu0 0
    %1411 = vperm.xlu0 %1410, %v1360
    %v1412 = vpop.permute.xlu0 %1411
    %1415 = vset.pattern.permute.xlu0 0
    %1416 = vperm.xlu0 %1415, %v1361
    %v1417 = vpop.permute.xlu0 %1416
    %1420 = vset.pattern.permute.xlu0 0
    %1421 = vperm.xlu0 %1420, %v1362
    %v1422 = vpop.permute.xlu0 %1421
    %v1424 = vsub.f32 %v1283, %v1407
    %v1425 = vsub.f32 %v1286, %v1412
    %v1426 = vsub.f32 %v1289, %v1417
    %v1427 = vsub.f32 %v1292, %v1422
    %v1428 = vadd.f32 %v1400, 1e-05
    %v1429 = vadd.f32 %v1401, 1e-05
    %v1430 = vadd.f32 %v1402, 1e-05
    %v1431 = vadd.f32 %v1403, 1e-05
    %v1432 = vrsqrt.pop %v1428
    %v1433 = vmul.f32 %v1432, %v1428
    %v1434 = vmul.f32 %v1433, %v1432
    %v1435 = vmul.f32 0.5, %v1434
    %v1436 = vsub.f32 1.5, %v1435
    %v1437 = vmul.f32 %v1432, %v1436
    %vm1438 = vweird.f32 %v1428
    %vm1439 = vweird.f32 %v1432
    %vm1440 = vmor %vm1438, %vm1439
    %v1441 = vsel %vm1440, %v1432, %v1437
    %v1442 = vrsqrt.pop %v1429
    %v1443 = vmul.f32 %v1442, %v1429
    %v1444 = vmul.f32 %v1443, %v1442
    %v1445 = vmul.f32 0.5, %v1444
    %v1446 = vsub.f32 1.5, %v1445
    %v1447 = vmul.f32 %v1442, %v1446
    %vm1448 = vweird.f32 %v1429
    %vm1449 = vweird.f32 %v1442
    %vm1450 = vmor %vm1448, %vm1449
    %v1451 = vsel %vm1450, %v1442, %v1447
    %v1452 = vrsqrt.pop %v1430
    %v1453 = vmul.f32 %v1452, %v1430
    %v1454 = vmul.f32 %v1453, %v1452
    %v1455 = vmul.f32 0.5, %v1454
    %v1456 = vsub.f32 1.5, %v1455
    %v1457 = vmul.f32 %v1452, %v1456
    %vm1458 = vweird.f32 %v1430
    %vm1459 = vweird.f32 %v1452
    %vm1460 = vmor %vm1458, %vm1459
    %v1461 = vsel %vm1460, %v1452, %v1457
    %v1462 = vrsqrt.pop %v1431
    %v1463 = vmul.f32 %v1462, %v1431
    %v1464 = vmul.f32 %v1463, %v1462
    %v1465 = vmul.f32 0.5, %v1464
    %v1466 = vsub.f32 1.5, %v1465
    %v1467 = vmul.f32 %v1462, %v1466
    %vm1468 = vweird.f32 %v1431
    %vm1469 = vweird.f32 %v1462
    %vm1470 = vmor %vm1468, %vm1469
    %v1471 = vsel %vm1470, %v1462, %v1467
    %1473 = vset.pattern.permute.xlu0 0
    %1474 = vperm.xlu0 %1473, %v1441
    %v1475 = vpop.permute.xlu0 %1474
    %1478 = vset.pattern.permute.xlu0 0
    %1479 = vperm.xlu0 %1478, %v1451
    %v1480 = vpop.permute.xlu0 %1479
    %1483 = vset.pattern.permute.xlu0 0
    %1484 = vperm.xlu0 %1483, %v1461
    %v1485 = vpop.permute.xlu0 %1484
    %1488 = vset.pattern.permute.xlu0 0
    %1489 = vperm.xlu0 %1488, %v1471
    %v1490 = vpop.permute.xlu0 %1489
    %v1492 = vmul.f32 %v1424, %v1475
    %v1493 = vmul.f32 %v1425, %v1480
    %v1494 = vmul.f32 %v1426, %v1485
    %v1495 = vmul.f32 %v1427, %v1490
    %1496 = vset.pattern.permute.xlu0 10
    %1497 = vperm.xlu0 %1496, %v117
    %v1498 = vpop.permute.xlu0 %1497
    %1500 = vset.pattern.permute.xlu0 10
    %1501 = vperm.xlu0 %1500, %v118
    %v1502 = vpop.permute.xlu0 %1501
    %1504 = vset.pattern.permute.xlu0 10
    %1505 = vperm.xlu0 %1504, %v119
    %v1506 = vpop.permute.xlu0 %1505
    %1508 = vset.pattern.permute.xlu0 10
    %1509 = vperm.xlu0 %1508, %v120
    %v1510 = vpop.permute.xlu0 %1509
    %v1512 = vmul.f32 %v1492, %v1498
    %v1513 = vmul.f32 %v1493, %v1502
    %v1514 = vmul.f32 %v1494, %v1506
    %v1515 = vmul.f32 %v1495, %v1510
    %1516 = vset.pattern.permute.xlu0 11
    %1517 = vperm.xlu0 %1516, %v117
    %v1518 = vpop.permute.xlu0 %1517
    %1520 = vset.pattern.permute.xlu0 11
    %1521 = vperm.xlu0 %1520, %v118
    %v1522 = vpop.permute.xlu0 %1521
    %1524 = vset.pattern.permute.xlu0 11
    %1525 = vperm.xlu0 %1524, %v119
    %v1526 = vpop.permute.xlu0 %1525
    %1528 = vset.pattern.permute.xlu0 11
    %1529 = vperm.xlu0 %1528, %v120
    %v1530 = vpop.permute.xlu0 %1529
    %v1532 = vadd.f32 %v1512, %v1518
    %v1533 = vadd.f32 %v1513, %v1522
    %v1534 = vadd.f32 %v1514, %v1526
    %v1535 = vadd.f32 %v1515, %v1530
    %v1536 = vadd.f32 %v1532, %v1176
    %v1537 = vadd.f32 %v1533, %v1177
    %v1538 = vadd.f32 %v1534, %v1178
    %v1539 = vadd.f32 %v1535, %v1179
    %v1540 = vld [vmem:[#allocation8] sm:$0xff]
    %v1541 = vld [vmem:[#allocation8 + $0x8] sm:$0xff]
    %v1542 = vld [vmem:[#allocation8 + $0x10] sm:$0xff]
    %v1543 = vld [vmem:[#allocation8 + $0x18] sm:$0xff]
    %v1544 = vld [vmem:[#allocation8 + $0x20] sm:$0xff]
    %v1545 = vld [vmem:[#allocation8 + $0x28] sm:$0xff]
    %v1546 = vld [vmem:[#allocation8 + $0x30] sm:$0xff]
    %v1547 = vld [vmem:[#allocation8 + $0x38] sm:$0xff]
    %v1548 = vld [vmem:[#allocation8 + $0x40] sm:$0xff]
    %v1549 = vld [vmem:[#allocation8 + $0x48] sm:$0xff]
    %v1550 = vld [vmem:[#allocation8 + $0x50] sm:$0xff]
    %v1551 = vld [vmem:[#allocation8 + $0x58] sm:$0xff]
    %v1552 = vld [vmem:[#allocation8 + $0x60] sm:$0xff]
    %v1553 = vld [vmem:[#allocation8 + $0x68] sm:$0xff]
    %v1554 = vld [vmem:[#allocation8 + $0x70] sm:$0xff]
    %v1555 = vld [vmem:[#allocation8 + $0x78] sm:$0xff]
    %v1556 = vld [vmem:[#allocation8 + $0x80] sm:$0xff]
    %v1557 = vld [vmem:[#allocation8 + $0x88] sm:$0xff]
    %v1558 = vld [vmem:[#allocation8 + $0x90] sm:$0xff]
    %v1559 = vld [vmem:[#allocation8 + $0x98] sm:$0xff]
    %v1560 = vld [vmem:[#allocation8 + $0xa0] sm:$0xff]
    %v1561 = vld [vmem:[#allocation8 + $0xa8] sm:$0xff]
    %v1562 = vld [vmem:[#allocation8 + $0xb0] sm:$0xff]
    %v1563 = vld [vmem:[#allocation8 + $0xb8] sm:$0xff]
    %v1564 = vld [vmem:[#allocation8 + $0xc0] sm:$0xff]
    %v1565 = vld [vmem:[#allocation8 + $0xc8] sm:$0xff]
    %v1566 = vld [vmem:[#allocation8 + $0xd0] sm:$0xff]
    %v1567 = vld [vmem:[#allocation8 + $0xd8] sm:$0xff]
    %v1568 = vld [vmem:[#allocation8 + $0xe0] sm:$0xff]
    %v1569 = vld [vmem:[#allocation8 + $0xe8] sm:$0xff]
    %v1570 = vld [vmem:[#allocation8 + $0xf0] sm:$0xff]
    %v1571 = vld [vmem:[#allocation8 + $0xf8] sm:$0xff]
    %1572 = vmatpush.msra.mxu0 %v1570
    %1573 = vmatpush.msra.mxu0 %v1568
    %1574 = vmatpush.msra.mxu0 %v1566
    %1575 = vmatpush.msra.mxu0 %v1564
    %1576 = vmatpush.msra.mxu0 %v1562
    %1577 = vmatpush.msra.mxu0 %v1560
    %1578 = vmatpush.msra.mxu0 %v1558
    %1579 = vmatpush.msra.mxu0 %v1556
    %1580 = vmatpush.msra.mxu0 %v1554
    %1581 = vmatpush.msra.mxu0 %v1552
    %1582 = vmatpush.msra.mxu0 %v1550
    %1583 = vmatpush.msra.mxu0 %v1548
    %1584 = vmatpush.msra.mxu0 %v1546
    %1585 = vmatpush.msra.mxu0 %v1544
    %1586 = vmatpush.msra.mxu0 %v1542
    %1587 = vmatpush.msra.mxu0 %v1540
    %1588 = vmatmul.f32.gmra.mxu0 %v1536
    %v1589 = vpop.f32.mrf.mxu0
    %v1590 = vadd.f32 0.0, %v1589
    %1591 = vmatmul.f32.gmra.mxu0 %v1537
    %v1592 = vpop.f32.mrf.mxu0
    %v1593 = vadd.f32 0.0, %v1592
    %1594 = vmatmul.f32.gmra.mxu0 %v1538
    %v1595 = vpop.f32.mrf.mxu0
    %v1596 = vadd.f32 0.0, %v1595
    %1597 = vmatmul.f32.gmra.mxu0 %v1539
    %v1598 = vpop.f32.mrf.mxu0
    %v1599 = vadd.f32 0.0, %v1598
    %1600 = vdwg.mxu0
    %1601 = vmatpush.msra.mxu0 %v1571
    %1602 = vmatpush.msra.mxu0 %v1569
    %1603 = vmatpush.msra.mxu0 %v1567
    %1604 = vmatpush.msra.mxu0 %v1565
    %1605 = vmatpush.msra.mxu0 %v1563
    %1606 = vmatpush.msra.mxu0 %v1561
    %1607 = vmatpush.msra.mxu0 %v1559
    %1608 = vmatpush.msra.mxu0 %v1557
    %1609 = vmatpush.msra.mxu0 %v1555
    %1610 = vmatpush.msra.mxu0 %v1553
    %1611 = vmatpush.msra.mxu0 %v1551
    %1612 = vmatpush.msra.mxu0 %v1549
    %1613 = vmatpush.msra.mxu0 %v1547
    %1614 = vmatpush.msra.mxu0 %v1545
    %1615 = vmatpush.msra.mxu0 %v1543
    %1616 = vmatpush.msra.mxu0 %v1541
    %1617 = vmatmul.f32.gmra.mxu0 %v1536
    %v1618 = vpop.f32.mrf.mxu0
    %v1619 = vadd.f32 0.0, %v1618
    %1620 = vmatmul.f32.gmra.mxu0 %v1537
    %v1621 = vpop.f32.mrf.mxu0
    %v1622 = vadd.f32 0.0, %v1621
    %1623 = vmatmul.f32.gmra.mxu0 %v1538
    %v1624 = vpop.f32.mrf.mxu0
    %v1625 = vadd.f32 0.0, %v1624
    %1626 = vmatmul.f32.gmra.mxu0 %v1539
    %v1627 = vpop.f32.mrf.mxu0
    %v1628 = vadd.f32 0.0, %v1627
    %1629 = vdwg.mxu0
    %v1630 = vld [vmem:[%s7] sm:$0xff]
    %v1631 = vld [vmem:[%s7 + $0x8] sm:$0xff]
    %v1632 = vld [vmem:[%s7 + $0x10] sm:$0xff]
    %v1633 = vld [vmem:[%s7 + $0x18] sm:$0xff]
    %v1634 = vld [vmem:[%s7 + $0x20] sm:$0xff]
    %v1635 = vld [vmem:[%s7 + $0x28] sm:$0xff]
    %v1636 = vld [vmem:[%s7 + $0x30] sm:$0xff]
    %v1637 = vld [vmem:[%s7 + $0x38] sm:$0xff]
    %v1638 = vld [vmem:[%s7 + $0x40] sm:$0xff]
    %v1639 = vld [vmem:[%s7 + $0x48] sm:$0xff]
    %v1640 = vld [vmem:[%s7 + $0x50] sm:$0xff]
    %v1641 = vld [vmem:[%s7 + $0x58] sm:$0xff]
    %v1642 = vld [vmem:[%s7 + $0x60] sm:$0xff]
    %v1643 = vld [vmem:[%s7 + $0x68] sm:$0xff]
    %v1644 = vld [vmem:[%s7 + $0x70] sm:$0xff]
    %v1645 = vld [vmem:[%s7 + $0x78] sm:$0xff]
    %1646 = vmatpush.msra.mxu0 %v1645
    %1647 = vmatpush.msra.mxu0 %v1644
    %1648 = vmatpush.msra.mxu0 %v1643
    %1649 = vmatpush.msra.mxu0 %v1642
    %1650 = vmatpush.msra.mxu0 %v1641
    %1651 = vmatpush.msra.mxu0 %v1640
    %1652 = vmatpush.msra.mxu0 %v1639
    %1653 = vmatpush.msra.mxu0 %v1638
    %1654 = vmatpush.msra.mxu0 %v1637
    %1655 = vmatpush.msra.mxu0 %v1636
    %1656 = vmatpush.msra.mxu0 %v1635
    %1657 = vmatpush.msra.mxu0 %v1634
    %1658 = vmatpush.msra.mxu0 %v1633
    %1659 = vmatpush.msra.mxu0 %v1632
    %1660 = vmatpush.msra.mxu0 %v1631
    %1661 = vmatpush.msra.mxu0 %v1630
    %1662 = vmatmul.f32.gmra.mxu0 %v1536
    %v1663 = vpop.f32.mrf.mxu0
    %v1664 = vadd.f32 0.0, %v1663
    %1665 = vmatmul.f32.gmra.mxu0 %v1537
    %v1666 = vpop.f32.mrf.mxu0
    %v1667 = vadd.f32 0.0, %v1666
    %1668 = vmatmul.f32.gmra.mxu0 %v1538
    %v1669 = vpop.f32.mrf.mxu0
    %v1670 = vadd.f32 0.0, %v1669
    %1671 = vmatmul.f32.gmra.mxu0 %v1539
    %v1672 = vpop.f32.mrf.mxu0
    %v1673 = vadd.f32 0.0, %v1672
    %1674 = vdwg.mxu0
    %1675 = vset.pattern.permute.xlu0 12
    %1676 = vperm.xlu0 %1675, %v117
    %v1677 = vpop.permute.xlu0 %1676
    %1679 = vset.pattern.permute.xlu0 12
    %1680 = vperm.xlu0 %1679, %v118
    %v1681 = vpop.permute.xlu0 %1680
    %1683 = vset.pattern.permute.xlu0 12
    %1684 = vperm.xlu0 %1683, %v119
    %v1685 = vpop.permute.xlu0 %1684
    %1687 = vset.pattern.permute.xlu0 12
    %1688 = vperm.xlu0 %1687, %v120
    %v1689 = vpop.permute.xlu0 %1688
    %v1691 = vmul.f32 %v1664, %v1677
    %v1692 = vmul.f32 %v1667, %v1681
    %v1693 = vmul.f32 %v1670, %v1685
    %v1694 = vmul.f32 %v1673, %v1689
    %1695 = vset.pattern.permute.xlu0 15
    %1696 = vperm.xlu0 %1695, %v117
    %v1697 = vpop.permute.xlu0 %1696
    %1699 = vset.pattern.permute.xlu0 15
    %1700 = vperm.xlu0 %1699, %v118
    %v1701 = vpop.permute.xlu0 %1700
    %1703 = vset.pattern.permute.xlu0 15
    %1704 = vperm.xlu0 %1703, %v119
    %v1705 = vpop.permute.xlu0 %1704
    %1707 = vset.pattern.permute.xlu0 15
    %1708 = vperm.xlu0 %1707, %v120
    %v1709 = vpop.permute.xlu0 %1708
    %v1711 = vadd.f32 %v1691, %v1697
    %v1712 = vadd.f32 %v1692, %v1701
    %v1713 = vadd.f32 %v1693, %v1705
    %v1714 = vadd.f32 %v1694, %v1709
    %v1715 = vmax.f32 %v1711, 0.0
    %v1716 = vmax.f32 %v1712, 0.0
    %v1717 = vmax.f32 %v1713, 0.0
    %v1718 = vmax.f32 %v1714, 0.0
    %1719 = vset.pattern.permute.xlu0 13
    %1720 = vperm.xlu0 %1719, %v117
    %v1721 = vpop.permute.xlu0 %1720
    %1723 = vset.pattern.permute.xlu0 13
    %1724 = vperm.xlu0 %1723, %v118
    %v1725 = vpop.permute.xlu0 %1724
    %1727 = vset.pattern.permute.xlu0 13
    %1728 = vperm.xlu0 %1727, %v119
    %v1729 = vpop.permute.xlu0 %1728
    %1731 = vset.pattern.permute.xlu0 13
    %1732 = vperm.xlu0 %1731, %v120
    %v1733 = vpop.permute.xlu0 %1732
    %v1735 = vmul.f32 %v1715, %v1721
    %v1736 = vmul.f32 %v1716, %v1725
    %v1737 = vmul.f32 %v1717, %v1729
    %v1738 = vmul.f32 %v1718, %v1733
    %1739 = vset.pattern.permute.xlu0 16
    %1740 = vperm.xlu0 %1739, %v117
    %v1741 = vpop.permute.xlu0 %1740
    %1743 = vset.pattern.permute.xlu0 16
    %1744 = vperm.xlu0 %1743, %v118
    %v1745 = vpop.permute.xlu0 %1744
    %1747 = vset.pattern.permute.xlu0 16
    %1748 = vperm.xlu0 %1747, %v119
    %v1749 = vpop.permute.xlu0 %1748
    %1751 = vset.pattern.permute.xlu0 16
    %1752 = vperm.xlu0 %1751, %v120
    %v1753 = vpop.permute.xlu0 %1752
    %v1755 = vadd.f32 %v1735, %v1741
    %v1756 = vadd.f32 %v1736, %v1745
    %v1757 = vadd.f32 %v1737, %v1749
    %v1758 = vadd.f32 %v1738, %v1753
    %v1759 = vmax.f32 %v1755, 0.0
    %v1760 = vmax.f32 %v1756, 0.0
    %v1761 = vmax.f32 %v1757, 0.0
    %v1762 = vmax.f32 %v1758, 0.0
    %1763 = vset.pattern.permute.xlu0 14
    %1764 = vperm.xlu0 %1763, %v117
    %v1765 = vpop.permute.xlu0 %1764
    %1767 = vset.pattern.permute.xlu0 14
    %1768 = vperm.xlu0 %1767, %v118
    %v1769 = vpop.permute.xlu0 %1768
    %1771 = vset.pattern.permute.xlu0 14
    %1772 = vperm.xlu0 %1771, %v119
    %v1773 = vpop.permute.xlu0 %1772
    %1775 = vset.pattern.permute.xlu0 14
    %1776 = vperm.xlu0 %1775, %v120
    %v1777 = vpop.permute.xlu0 %1776
    %v1779 = vmul.f32 %v1759, %v1765
    %v1780 = vmul.f32 %v1760, %v1769
    %v1781 = vmul.f32 %v1761, %v1773
    %v1782 = vmul.f32 %v1762, %v1777
    %1783 = vset.pattern.permute.xlu0 17
    %1784 = vperm.xlu0 %1783, %v117
    %v1785 = vpop.permute.xlu0 %1784
    %1787 = vset.pattern.permute.xlu0 17
    %1788 = vperm.xlu0 %1787, %v118
    %v1789 = vpop.permute.xlu0 %1788
    %1791 = vset.pattern.permute.xlu0 17
    %1792 = vperm.xlu0 %1791, %v119
    %v1793 = vpop.permute.xlu0 %1792
    %1795 = vset.pattern.permute.xlu0 17
    %1796 = vperm.xlu0 %1795, %v120
    %v1797 = vpop.permute.xlu0 %1796
    %v1799 = vadd.f32 %v1779, %v1785
    %v1800 = vadd.f32 %v1780, %v1789
    %v1801 = vadd.f32 %v1781, %v1793
    %v1802 = vadd.f32 %v1782, %v1797
    %v1803 = vmax.f32 %v1799, 0.0
    %v1804 = vmax.f32 %v1800, 0.0
    %v1805 = vmax.f32 %v1801, 0.0
    %v1806 = vmax.f32 %v1802, 0.0
    %v1807 = vld [vmem:[#allocation10] sm:$0xff]
    %1809 = vset.pattern.permute.xlu0 0
    %1810 = vperm.xlu0 %1809, %v1803
    %v1811 = vpop.permute.xlu0 %1810
    %1814 = vset.pattern.permute.xlu0 0
    %1815 = vperm.xlu0 %1814, %v1804
    %v1816 = vpop.permute.xlu0 %1815
    %1819 = vset.pattern.permute.xlu0 0
    %1820 = vperm.xlu0 %1819, %v1805
    %v1821 = vpop.permute.xlu0 %1820
    %1824 = vset.pattern.permute.xlu0 0
    %1825 = vperm.xlu0 %1824, %v1806
    %v1826 = vpop.permute.xlu0 %1825
    %v1829 = vperm.slane %v1807, 0
    %v1830 = vperm.slane %v1807, 4
    %v1833 = vperm.slane %v1829, 0
    %v1834 = vperm.slane %v1830, 0
    %v1835 = vmul.f32 %v1811, %v1833
    %v1836 = vmul.f32 %v1811, %v1834
    %v1837 = vmul.f32 %v1816, %v1833
    %v1838 = vmul.f32 %v1816, %v1834
    %v1839 = vmul.f32 %v1821, %v1833
    %v1840 = vmul.f32 %v1821, %v1834
    %v1841 = vmul.f32 %v1826, %v1833
    %v1842 = vmul.f32 %v1826, %v1834
    %1843 = vset.pattern.permute.xlu0 1
    %1844 = vperm.xlu0 %1843, %v1803
    %v1845 = vpop.permute.xlu0 %1844
    %1847 = vset.pattern.permute.xlu0 1
    %1848 = vperm.xlu0 %1847, %v1804
    %v1849 = vpop.permute.xlu0 %1848
    %1851 = vset.pattern.permute.xlu0 1
    %1852 = vperm.xlu0 %1851, %v1805
    %v1853 = vpop.permute.xlu0 %1852
    %1855 = vset.pattern.permute.xlu0 1
    %1856 = vperm.xlu0 %1855, %v1806
    %v1857 = vpop.permute.xlu0 %1856
    %v1859 = vperm.slane %v1807, 1
    %v1860 = vperm.slane %v1807, 5
    %v1863 = vperm.slane %v1859, 1
    %v1864 = vperm.slane %v1860, 1
    %v1865 = vmul.f32 %v1845, %v1863
    %v1866 = vmul.f32 %v1845, %v1864
    %v1867 = vmul.f32 %v1849, %v1863
    %v1868 = vmul.f32 %v1849, %v1864
    %v1869 = vmul.f32 %v1853, %v1863
    %v1870 = vmul.f32 %v1853, %v1864
    %v1871 = vmul.f32 %v1857, %v1863
    %v1872 = vmul.f32 %v1857, %v1864
    %v1873 = vadd.f32 %v1835, %v1865
    %v1874 = vadd.f32 %v1836, %v1866
    %v1875 = vadd.f32 %v1837, %v1867
    %v1876 = vadd.f32 %v1838, %v1868
    %v1877 = vadd.f32 %v1839, %v1869
    %v1878 = vadd.f32 %v1840, %v1870
    %v1879 = vadd.f32 %v1841, %v1871
    %v1880 = vadd.f32 %v1842, %v1872
    %1881 = vset.pattern.permute.xlu0 2
    %1882 = vperm.xlu0 %1881, %v1803
    %v1883 = vpop.permute.xlu0 %1882
    %1885 = vset.pattern.permute.xlu0 2
    %1886 = vperm.xlu0 %1885, %v1804
    %v1887 = vpop.permute.xlu0 %1886
    %1889 = vset.pattern.permute.xlu0 2
    %1890 = vperm.xlu0 %1889, %v1805
    %v1891 = vpop.permute.xlu0 %1890
    %1893 = vset.pattern.permute.xlu0 2
    %1894 = vperm.xlu0 %1893, %v1806
    %v1895 = vpop.permute.xlu0 %1894
    %v1897 = vperm.slane %v1807, 2
    %v1898 = vperm.slane %v1807, 6
    %v1901 = vperm.slane %v1897, 2
    %v1902 = vperm.slane %v1898, 2
    %v1903 = vmul.f32 %v1883, %v1901
    %v1904 = vmul.f32 %v1883, %v1902
    %v1905 = vmul.f32 %v1887, %v1901
    %v1906 = vmul.f32 %v1887, %v1902
    %v1907 = vmul.f32 %v1891, %v1901
    %v1908 = vmul.f32 %v1891, %v1902
    %v1909 = vmul.f32 %v1895, %v1901
    %v1910 = vmul.f32 %v1895, %v1902
    %v1911 = vadd.f32 %v1873, %v1903
    %v1912 = vadd.f32 %v1874, %v1904
    %v1913 = vadd.f32 %v1875, %v1905
    %v1914 = vadd.f32 %v1876, %v1906
    %v1915 = vadd.f32 %v1877, %v1907
    %v1916 = vadd.f32 %v1878, %v1908
    %v1917 = vadd.f32 %v1879, %v1909
    %v1918 = vadd.f32 %v1880, %v1910
    %1919 = vset.pattern.permute.xlu0 3
    %1920 = vperm.xlu0 %1919, %v1803
    %v1921 = vpop.permute.xlu0 %1920
    %1923 = vset.pattern.permute.xlu0 3
    %1924 = vperm.xlu0 %1923, %v1804
    %v1925 = vpop.permute.xlu0 %1924
    %1927 = vset.pattern.permute.xlu0 3
    %1928 = vperm.xlu0 %1927, %v1805
    %v1929 = vpop.permute.xlu0 %1928
    %1931 = vset.pattern.permute.xlu0 3
    %1932 = vperm.xlu0 %1931, %v1806
    %v1933 = vpop.permute.xlu0 %1932
    %v1935 = vperm.slane %v1807, 3
    %v1936 = vperm.slane %v1807, 7
    %v1939 = vperm.slane %v1935, 3
    %v1940 = vperm.slane %v1936, 3
    %v1941 = vmul.f32 %v1921, %v1939
    %v1942 = vmul.f32 %v1921, %v1940
    %v1943 = vmul.f32 %v1925, %v1939
    %v1944 = vmul.f32 %v1925, %v1940
    %v1945 = vmul.f32 %v1929, %v1939
    %v1946 = vmul.f32 %v1929, %v1940
    %v1947 = vmul.f32 %v1933, %v1939
    %v1948 = vmul.f32 %v1933, %v1940
    %v1949 = vadd.f32 %v1911, %v1941
    %v1950 = vadd.f32 %v1912, %v1942
    %v1951 = vadd.f32 %v1913, %v1943
    %v1952 = vadd.f32 %v1914, %v1944
    %v1953 = vadd.f32 %v1915, %v1945
    %v1954 = vadd.f32 %v1916, %v1946
    %v1955 = vadd.f32 %v1917, %v1947
    %v1956 = vadd.f32 %v1918, %v1948
    %v1957 = vxor.u32 %v1949, 2147483648
    %v1958 = vxor.u32 %v1950, 2147483648
    %v1959 = vxor.u32 %v1951, 2147483648
    %v1960 = vxor.u32 %v1952, 2147483648
    %v1961 = vxor.u32 %v1953, 2147483648
    %v1962 = vxor.u32 %v1954, 2147483648
    %v1963 = vxor.u32 %v1955, 2147483648
    %v1964 = vxor.u32 %v1956, 2147483648
    %v1965 = vmul.f32 %v1957, 1.442695
    %v1966 = vpow.pop %v1965
    %v1967 = vmul.f32 %v1958, 1.442695
    %v1968 = vpow.pop %v1967
    %v1969 = vmul.f32 %v1959, 1.442695
    %v1970 = vpow.pop %v1969
    %v1971 = vmul.f32 %v1960, 1.442695
    %v1972 = vpow.pop %v1971
    %v1973 = vmul.f32 %v1961, 1.442695
    %v1974 = vpow.pop %v1973
    %v1975 = vmul.f32 %v1962, 1.442695
    %v1976 = vpow.pop %v1975
    %v1977 = vmul.f32 %v1963, 1.442695
    %v1978 = vpow.pop %v1977
    %v1979 = vmul.f32 %v1964, 1.442695
    %v1980 = vpow.pop %v1979
    %v1981 = vadd.f32 %v1966, 1.0
    %v1982 = vadd.f32 %v1968, 1.0
    %v1983 = vadd.f32 %v1970, 1.0
    %v1984 = vadd.f32 %v1972, 1.0
    %v1985 = vadd.f32 %v1974, 1.0
    %v1986 = vadd.f32 %v1976, 1.0
    %v1987 = vadd.f32 %v1978, 1.0
    %v1988 = vadd.f32 %v1980, 1.0
    %v1989 = vrcp.pop %v1981
    %v1990 = vmul.f32 %v1981, %v1989
    %v1991 = vsub.f32 1.0, %v1990
    %v1992 = vmul.f32 %v1989, %v1991
    %v1993 = vadd.f32 %v1989, %v1992
    %vm1994 = vweird.f32 %v1981
    %vm1995 = vweird.f32 %v1989
    %vm1996 = vmor %vm1994, %vm1995
    %v1997 = vsel %vm1996, %v1989, %v1993
    %v1998 = vand.u32 2147483647, %v1981
    %vm1999 = vcmp.eq.f32.partialorder %v1998, 8.507059e+37
    %v2000 = vand.u32 %v1981, 2147483648
    %v2001 = vor.u32 1.1754944e-38, %v2000
    %v2002 = vsel %vm1999, %v2001, %v1997
    %v2003 = vmul.f32 1.0, %v2002
    %v2004 = vrcp.pop %v1982
    %v2005 = vmul.f32 %v1982, %v2004
    %v2006 = vsub.f32 1.0, %v2005
    %v2007 = vmul.f32 %v2004, %v2006
    %v2008 = vadd.f32 %v2004, %v2007
    %vm2009 = vweird.f32 %v1982
    %vm2010 = vweird.f32 %v2004
    %vm2011 = vmor %vm2009, %vm2010
    %v2012 = vsel %vm2011, %v2004, %v2008
    %v2013 = vand.u32 2147483647, %v1982
    %vm2014 = vcmp.eq.f32.partialorder %v2013, 8.507059e+37
    %v2015 = vand.u32 %v1982, 2147483648
    %v2016 = vor.u32 1.1754944e-38, %v2015
    %v2017 = vsel %vm2014, %v2016, %v2012
    %v2018 = vmul.f32 1.0, %v2017
    %v2019 = vrcp.pop %v1983
    %v2020 = vmul.f32 %v1983, %v2019
    %v2021 = vsub.f32 1.0, %v2020
    %v2022 = vmul.f32 %v2019, %v2021
    %v2023 = vadd.f32 %v2019, %v2022
    %vm2024 = vweird.f32 %v1983
    %vm2025 = vweird.f32 %v2019
    %vm2026 = vmor %vm2024, %vm2025
    %v2027 = vsel %vm2026, %v2019, %v2023
    %v2028 = vand.u32 2147483647, %v1983
    %vm2029 = vcmp.eq.f32.partialorder %v2028, 8.507059e+37
    %v2030 = vand.u32 %v1983, 2147483648
    %v2031 = vor.u32 1.1754944e-38, %v2030
    %v2032 = vsel %vm2029, %v2031, %v2027
    %v2033 = vmul.f32 1.0, %v2032
    %v2034 = vrcp.pop %v1984
    %v2035 = vmul.f32 %v1984, %v2034
    %v2036 = vsub.f32 1.0, %v2035
    %v2037 = vmul.f32 %v2034, %v2036
    %v2038 = vadd.f32 %v2034, %v2037
    %vm2039 = vweird.f32 %v1984
    %vm2040 = vweird.f32 %v2034
    %vm2041 = vmor %vm2039, %vm2040
    %v2042 = vsel %vm2041, %v2034, %v2038
    %v2043 = vand.u32 2147483647, %v1984
    %vm2044 = vcmp.eq.f32.partialorder %v2043, 8.507059e+37
    %v2045 = vand.u32 %v1984, 2147483648
    %v2046 = vor.u32 1.1754944e-38, %v2045
    %v2047 = vsel %vm2044, %v2046, %v2042
    %v2048 = vmul.f32 1.0, %v2047
    %v2049 = vrcp.pop %v1985
    %v2050 = vmul.f32 %v1985, %v2049
    %v2051 = vsub.f32 1.0, %v2050
    %v2052 = vmul.f32 %v2049, %v2051
    %v2053 = vadd.f32 %v2049, %v2052
    %vm2054 = vweird.f32 %v1985
    %vm2055 = vweird.f32 %v2049
    %vm2056 = vmor %vm2054, %vm2055
    %v2057 = vsel %vm2056, %v2049, %v2053
    %v2058 = vand.u32 2147483647, %v1985
    %vm2059 = vcmp.eq.f32.partialorder %v2058, 8.507059e+37
    %v2060 = vand.u32 %v1985, 2147483648
    %v2061 = vor.u32 1.1754944e-38, %v2060
    %v2062 = vsel %vm2059, %v2061, %v2057
    %v2063 = vmul.f32 1.0, %v2062
    %v2064 = vrcp.pop %v1986
    %v2065 = vmul.f32 %v1986, %v2064
    %v2066 = vsub.f32 1.0, %v2065
    %v2067 = vmul.f32 %v2064, %v2066
    %v2068 = vadd.f32 %v2064, %v2067
    %vm2069 = vweird.f32 %v1986
    %vm2070 = vweird.f32 %v2064
    %vm2071 = vmor %vm2069, %vm2070
    %v2072 = vsel %vm2071, %v2064, %v2068
    %v2073 = vand.u32 2147483647, %v1986
    %vm2074 = vcmp.eq.f32.partialorder %v2073, 8.507059e+37
    %v2075 = vand.u32 %v1986, 2147483648
    %v2076 = vor.u32 1.1754944e-38, %v2075
    %v2077 = vsel %vm2074, %v2076, %v2072
    %v2078 = vmul.f32 1.0, %v2077
    %v2079 = vrcp.pop %v1987
    %v2080 = vmul.f32 %v1987, %v2079
    %v2081 = vsub.f32 1.0, %v2080
    %v2082 = vmul.f32 %v2079, %v2081
    %v2083 = vadd.f32 %v2079, %v2082
    %vm2084 = vweird.f32 %v1987
    %vm2085 = vweird.f32 %v2079
    %vm2086 = vmor %vm2084, %vm2085
    %v2087 = vsel %vm2086, %v2079, %v2083
    %v2088 = vand.u32 2147483647, %v1987
    %vm2089 = vcmp.eq.f32.partialorder %v2088, 8.507059e+37
    %v2090 = vand.u32 %v1987, 2147483648
    %v2091 = vor.u32 1.1754944e-38, %v2090
    %v2092 = vsel %vm2089, %v2091, %v2087
    %v2093 = vmul.f32 1.0, %v2092
    %v2094 = vrcp.pop %v1988
    %v2095 = vmul.f32 %v1988, %v2094
    %v2096 = vsub.f32 1.0, %v2095
    %v2097 = vmul.f32 %v2094, %v2096
    %v2098 = vadd.f32 %v2094, %v2097
    %vm2099 = vweird.f32 %v1988
    %vm2100 = vweird.f32 %v2094
    %vm2101 = vmor %vm2099, %vm2100
    %v2102 = vsel %vm2101, %v2094, %v2098
    %v2103 = vand.u32 2147483647, %v1988
    %vm2104 = vcmp.eq.f32.partialorder %v2103, 8.507059e+37
    %v2105 = vand.u32 %v1988, 2147483648
    %v2106 = vor.u32 1.1754944e-38, %v2105
    %v2107 = vsel %vm2104, %v2106, %v2102
    %v2108 = vmul.f32 1.0, %v2107
    %v2109 = vadd.f32 %v2003, 2.0
    %v2110 = vadd.f32 %v2018, 2.0
    %v2111 = vadd.f32 %v2033, 2.0
    %v2112 = vadd.f32 %v2048, 2.0
    %v2113 = vadd.f32 %v2063, 2.0
    %v2114 = vadd.f32 %v2078, 2.0
    %v2115 = vadd.f32 %v2093, 2.0
    %v2116 = vadd.f32 %v2108, 2.0
    %v2117 = vmul.f32 %v1590, %v2109
    %v2118 = vmul.f32 %v1619, %v2110
    %v2119 = vmul.f32 %v1593, %v2111
    %v2120 = vmul.f32 %v1622, %v2112
    %v2121 = vmul.f32 %v1596, %v2113
    %v2122 = vmul.f32 %v1625, %v2114
    %v2123 = vmul.f32 %v1599, %v2115
    %v2124 = vmul.f32 %v1628, %v2116
    %2125 = vst [vmem:[#allocation11] sm:$0xff] %v2117
    %2126 = vst [vmem:[#allocation11 + $0x8] sm:$0xff] %v2118
    %2127 = vst [vmem:[#allocation11 + $0x10] sm:$0xff] %v2119
    %2128 = vst [vmem:[#allocation11 + $0x18] sm:$0xff] %v2120
    %2129 = vst [vmem:[#allocation11 + $0x20] sm:$0xff] %v2121
    %2130 = vst [vmem:[#allocation11 + $0x28] sm:$0xff] %v2122
    %2131 = vst [vmem:[#allocation11 + $0x30] sm:$0xff] %v2123
    %2132 = vst [vmem:[#allocation11 + $0x38] sm:$0xff] %v2124
    // Predicated region
    $region58: #{tpu_custom_call.1} parent=1 // pred_check
      _
    $region59: #{tpu_custom_call.1} parent=1 // pred_check_branch
      %2134 = sbr.rel (0) target = $region61
    $region60: #{tpu_custom_call.1} parent=1 // pred_region
      %2136 = vsyncadd [#allocation4], 0
      %s2137 = sshll.u32 [#allocation11], 4
      %s2138 = int_to_ptr.vmem [resolvable:$true] %s2137
      %s2139 = sshll.u32 %s9, 4
      %s2140 = int_to_ptr.hbm [resolvable:$true] %s2139
      %2145 = dma.vmem_to_hbm [thread:$0]  %s2138, 1024, %s2140, [#allocation4], 256, 256, 16
    $region61: #{tpu_custom_call.1} parent=1 // pred_fallthru
      _
    // Predicated region
    $region62: #{tpu_custom_call.1} parent=1 // pred_check
      _
    $region63: #{tpu_custom_call.1} parent=1 // pred_check_branch
      %2147 = sbr.rel (0) target = $region65
    $region64: #{tpu_custom_call.1} parent=1 // pred_region
      %2149 = dma.done [#allocation4], 1024
    $region65: #{tpu_custom_call.1} parent=1 // pred_fallthru
      _
    %2150 = vsyncpa [#allocation3], 1
    %2151 = vsyncpa [#allocation6], 1
    %2152 = vsyncpa [#allocation9], 1
    %2153 = vsyncpa [#allocation4], 1

</llo_original>
